<compile_context>
chip_gen: v7x
topology: tpu7x:2x2x1
jax: 0.10.0
libtpu: 0.0.40
codegen_flags: <defaults>
</compile_context>

<pallas_src>
import functools

import jax
import jax.numpy as jnp
from jax.experimental import pallas as pl
from jax.experimental.pallas import tpu as pltpu


# ---------------------------------------------------------------------------
# Fused Pallas kernel: conv0+ReLU -> conv1+ReLU -> conv2, one batch element.
# Channels-on-sublanes / spatial-on-lanes layout.
# ---------------------------------------------------------------------------
def _fused_kernel(a_ref, w0_ref, b0_ref, w1_ref, b1_ref, w2_ref, b2_ref,
                  o_ref, big_ref, *, k, width, n):
    """
    a_ref  : (1, C0, n)        flat channels-first input (latent already folded)
    w0_ref : (C1, k*k*C0)      conv0 weights, [cout, tap*C0 + cin]
    b0_ref : (1, C1, 1)        per-batch conv0 bias (latent contribution folded in)
    w1_ref : (C1, k*k*C1)      conv1 weights
    b1_ref : (C1, 1)           conv1 bias
    w2_ref : (k*k, C1, 1)      conv2 (Cout=1) weights, per tap a (C1, 1) column
    b2_ref : (1, 1)            conv2 bias
    o_ref  : (1, 1, n)         lane-dense flat output row (valid region sliced outside)
    big_ref: (k*k*C1, n)       VMEM scratch for the K-stacked (im2col) operand
    """
    shifts = tuple(di * width + dj for di in range(k) for dj in range(k))
    c0 = a_ref.shape[1]
    c1 = w1_ref.shape[0]

    def build_big(a, cin):
        # Stage the k*k lane-rolled copies of `a` (cin, n) into big_ref rows
        # [0, k*k*cin).  Rolls ride the XLU; stores are sublane-aligned.
        for t, s in enumerate(shifts):
            rolled = a if s == 0 else pltpu.roll(a, shift=n - s, axis=1)
            big_ref[t * cin:(t + 1) * cin, :] = rolled

    # ---- conv0 + ReLU: one (C1, k*k*C0) @ (k*k*C0, n) MXU matmul -----------
    build_big(a_ref[0], c0)
    h0 = jnp.dot(w0_ref[...], big_ref[0:k * k * c0, :],
                 preferred_element_type=jnp.float32)
    a1 = jnp.maximum(h0 + b0_ref[0], 0.0)                    # (C1, n)

    # ---- conv1 + ReLU: one (C1, k*k*C1) @ (k*k*C1, n) MXU matmul -----------
    build_big(a1, c1)
    h1 = jnp.dot(w1_ref[...], big_ref[...],
                 preferred_element_type=jnp.float32)
    a2 = jnp.maximum(h1 + b1_ref[...], 0.0)                   # (C1, n)

    # ---- conv2 (Cout=1): VPU mul-acc over taps + cross-sublane reduction ---
    acc = jnp.zeros((c1, n), jnp.float32)
    for t, s in enumerate(shifts):
        rolled = a2 if s == 0 else pltpu.roll(a2, shift=n - s, axis=1)
        acc = acc + rolled * w2_ref[t]                        # (C1,1) lane-bcast
    out = jnp.sum(acc, axis=0, keepdims=True) + b2_ref[...]   # (1, n) lane-dense
    o_ref[0] = out.astype(o_ref.dtype)


# ---------------------------------------------------------------------------
# Forward wrapper (only tiny one-time formatting stays in XLA)
# ---------------------------------------------------------------------------
def local_statistics_network_forward(shl_input0, shl_input1, params):
    """shl_input0: (B, C0, H, W) NCHW feature maps; shl_input1: (B, L) latents."""
    B, C0, H, W = shl_input0.shape
    L = shl_input1.shape[1]
    k = params["w0"].shape[0]
    c1 = params["w0"].shape[-1]
    n = H * W
    n_layers = 3
    Ho = H - n_layers * (k - 1)
    Wo = W - n_layers * (k - 1)
    assert Ho >= 1 and Wo >= 1, "spatial dims too small for 3 VALID convs"

    # Fold the spatially-constant latent into conv0's bias (per batch element).
    w0_sp = params["w0"][:, :, :C0, :]                          # (k,k,C0,C1)
    w0_lat = params["w0"][:, :, C0:, :]                         # (k,k,L,C1)
    w_lat = jnp.sum(w0_lat, axis=(0, 1))                        # (L, C1)
    b0_batch = (params["b0"][None, :] + shl_input1 @ w_lat)     # (B, C1)
    b0_batch = b0_batch[:, :, None]                             # (B, C1, 1)

    # Flipped (channels-on-sublanes) weight layouts: [cout, tap*cin_dim + cin]
    w0f = jnp.transpose(w0_sp.reshape(k * k, C0, c1),
                        (2, 0, 1)).reshape(c1, k * k * C0)
    w1f = jnp.transpose(params["w1"].reshape(k * k, c1, c1),
                        (2, 0, 1)).reshape(c1, k * k * c1)
    w2c = params["w2"].reshape(k * k, c1, 1)                    # per-tap columns
    b1 = params["b1"].reshape(c1, 1)
    b2 = params["b2"].reshape(1, 1)

    # NCHW -> (B, C, H*W): a pure reshape, no transpose needed in this layout.
    a0 = shl_input0.reshape(B, C0, n)

    out_flat = pl.pallas_call(
        functools.partial(_fused_kernel, k=k, width=W, n=n),
        out_shape=jax.ShapeDtypeStruct((B, 1, n), jnp.float32),
        grid_spec=pltpu.PrefetchScalarGridSpec(
            num_scalar_prefetch=0,
            grid=(B,),
            in_specs=[
                pl.BlockSpec((1, C0, n), lambda b: (b, 0, 0)),
                pl.BlockSpec((c1, k * k * C0), lambda b: (0, 0)),
                pl.BlockSpec((1, c1, 1), lambda b: (b, 0, 0)),
                pl.BlockSpec((c1, k * k * c1), lambda b: (0, 0)),
                pl.BlockSpec((c1, 1), lambda b: (0, 0)),
                pl.BlockSpec((k * k, c1, 1), lambda b: (0, 0, 0)),
                pl.BlockSpec((1, 1), lambda b: (0, 0)),
            ],
            out_specs=pl.BlockSpec((1, 1, n), lambda b: (b, 0, 0)),
            scratch_shapes=[pltpu.VMEM((k * k * c1, n), jnp.float32)],
        ),
        compiler_params=pltpu.CompilerParams(
            dimension_semantics=("parallel",)),   # both v7x TCs take a batch elt
    )(a0, w0f, b0_batch, w1f, b1, w2c, b2)

    # Valid outputs sit at flat lane index i*W + j with i < Ho, j < Wo.
    out = out_flat[:, 0, :].reshape(B, H, W)[:, :Ho, :Wo]       # (B, Ho, Wo)
    return out[:, None, :, :]                                   # (B, 1, Ho, Wo)


# ---------------------------------------------------------------------------
# Pure-JAX reference (for correctness check)
# ---------------------------------------------------------------------------
def reference_forward(shl_input0_nchw, shl_input1, params):
    B, C0, H, W = shl_input0_nchw.shape
    L = shl_input1.shape[1]
    x = jnp.transpose(shl_input0_nchw, (0, 2, 3, 1))
    v = jnp.broadcast_to(shl_input1[:, None, None, :], (B, H, W, L))
    h = jnp.concatenate([x, v], axis=-1)
    dn = ("NHWC", "HWIO", "NHWC")
    h = jax.nn.relu(jax.lax.conv_general_dilated(
        h, params["w0"], (1, 1), "VALID", dimension_numbers=dn) + params["b0"])
    h = jax.nn.relu(jax.lax.conv_general_dilated(
        h, params["w1"], (1, 1), "VALID", dimension_numbers=dn) + params["b1"])
    o = jax.lax.conv_general_dilated(
        h, params["w2"], (1, 1), "VALID", dimension_numbers=dn) + params["b2"]
    return jnp.transpose(o, (0, 3, 1, 2))


# ---------------------------------------------------------------------------
if __name__ == "__main__":
    # Module hyper-parameters (consistent with the PyTorch module):
    #   feature_map_channels = 32, kernel_size = 3, latent_dim = 8,
    #   img_feature_channels = C0 + latent_dim = 16  (Conv0 input channels)
    B, C0, H, W = 2, 8, 16, 16
    latent_dim = 8
    feature_map_channels = 32
    kernel_size = 3
    img_feature_channels = C0 + latent_dim

    key = jax.random.PRNGKey(0)
    k_in0, k_in1, kw0, kb0, kw1, kb1, kw2, kb2 = jax.random.split(key, 8)

    # Deterministic parameter init (HWIO layout; equivalent to PyTorch OIHW
    # weights transposed (2,3,1,0)).
    params = {
        "w0": 0.05 * jax.random.normal(
            kw0, (kernel_size, kernel_size, img_feature_channels,
                  feature_map_channels), jnp.float32),
        "b0": 0.05 * jax.random.normal(kb0, (feature_map_channels,), jnp.float32),
        "w1": 0.05 * jax.random.normal(
            kw1, (kernel_size, kernel_size, feature_map_channels,
                  feature_map_channels), jnp.float32),
        "b1": 0.05 * jax.random.normal(kb1, (feature_map_channels,), jnp.float32),
        "w2": 0.05 * jax.random.normal(
            kw2, (kernel_size, kernel_size, feature_map_channels, 1), jnp.float32),
        "b2": 0.05 * jax.random.normal(kb2, (1,), jnp.float32),
    }

    # Inputs (PyTorch conventions): feature map NCHW, representation (B, latent_dim)
    shl_input0 = jax.random.normal(k_in0, (B, C0, H, W), jnp.float32)
    shl_input1 = jax.random.normal(k_in1, (B, latent_dim), jnp.float32)

    out = jax.jit(local_statistics_network_forward)(shl_input0, shl_input1, params)
    out = jax.block_until_ready(out)

    expected_hw = H - 3 * (kernel_size - 1)
    assert out.shape == (B, 1, expected_hw, expected_hw), out.shape

    ref = jax.block_until_ready(reference_forward(shl_input0, shl_input1, params))
    assert jnp.allclose(out, ref, atol=1e-4, rtol=1e-4), float(
        jnp.max(jnp.abs(out - ref)))

    print("KERNEL_OK")
</pallas_src>

<mosaic_0001>
module attributes {stable_mosaic.version = 11 : i64} {
  func.func @_fused_kernel(%arg0: i32, %arg1: memref<1x8x256xf32, #tpu.memory_space<vmem>>, %arg2: memref<32x72xf32, #tpu.memory_space<vmem>>, %arg3: memref<1x32x1xf32, #tpu.memory_space<vmem>>, %arg4: memref<32x288xf32, #tpu.memory_space<vmem>>, %arg5: memref<32x1xf32, #tpu.memory_space<vmem>>, %arg6: memref<9x32x1xf32, #tpu.memory_space<vmem>>, %arg7: memref<1x1xf32, #tpu.memory_space<vmem>>, %arg8: memref<1x1x256xf32, #tpu.memory_space<vmem>>, %arg9: memref<288x256xf32, #tpu.memory_space<vmem>>) attributes {dimension_semantics = [#tpu.dimension_semantics<parallel>], iteration_bounds = array<i64: 2>, scalar_prefetch = 0 : i64, scratch_operands = 1 : i64, tpu.core_type = #tpu.core_type<tc>, window_params = [{transform_indices = @transform_0, window_bounds = array<i64: 1, 8, 256>}, {pipeline_mode = #tpu.pipeline_mode<synchronous>, transform_indices = @transform_1, window_bounds = array<i64: 32, 72>}, {transform_indices = @transform_2, window_bounds = array<i64: 1, 32, 1>}, {pipeline_mode = #tpu.pipeline_mode<synchronous>, transform_indices = @transform_3, window_bounds = array<i64: 32, 288>}, {pipeline_mode = #tpu.pipeline_mode<synchronous>, transform_indices = @transform_4, window_bounds = array<i64: 32, 1>}, {pipeline_mode = #tpu.pipeline_mode<synchronous>, transform_indices = @transform_5, window_bounds = array<i64: 9, 32, 1>}, {pipeline_mode = #tpu.pipeline_mode<synchronous>, transform_indices = @transform_6, window_bounds = array<i64: 1, 1>}, {transform_indices = @transform_7, window_bounds = array<i64: 1, 1, 256>}]} {
    %c0 = arith.constant 0 : index
    %c0_0 = arith.constant 0 : index
    %c0_1 = arith.constant 0 : index
    %0 = vector.load %arg1[%c0, %c0_0, %c0_1] : memref<1x8x256xf32, #tpu.memory_space<vmem>>, vector<1x8x256xf32>
    %1 = vector.shape_cast %0 : vector<1x8x256xf32> to vector<8x256xf32>
    %c0_2 = arith.constant 0 : index
    %c0_3 = arith.constant 0 : index
    %2 = vector.load %arg9[%c0_2, %c0_3] : memref<288x256xf32, #tpu.memory_space<vmem>>, vector<8x256xf32>
    tpu.vector_store %arg9[%c0_2, %c0_3], %1 {strides = array<i32>} : memref<288x256xf32, #tpu.memory_space<vmem>>, vector<8x256xf32>,
    %c255_i32 = arith.constant 255 : i32
    %3 = tpu.dynamic_rotate %1 by %c255_i32 dim 1 : vector<8x256xf32>, i32 -> vector<8x256xf32>
    %c8 = arith.constant 8 : index
    %c0_4 = arith.constant 0 : index
    %4 = vector.load %arg9[%c8, %c0_4] : memref<288x256xf32, #tpu.memory_space<vmem>>, vector<8x256xf32>
    tpu.vector_store %arg9[%c8, %c0_4], %3 {strides = array<i32>} : memref<288x256xf32, #tpu.memory_space<vmem>>, vector<8x256xf32>,
    %c254_i32 = arith.constant 254 : i32
    %5 = tpu.dynamic_rotate %1 by %c254_i32 dim 1 : vector<8x256xf32>, i32 -> vector<8x256xf32>
    %c16 = arith.constant 16 : index
    %c0_5 = arith.constant 0 : index
    %6 = vector.load %arg9[%c16, %c0_5] : memref<288x256xf32, #tpu.memory_space<vmem>>, vector<8x256xf32>
    tpu.vector_store %arg9[%c16, %c0_5], %5 {strides = array<i32>} : memref<288x256xf32, #tpu.memory_space<vmem>>, vector<8x256xf32>,
    %c240_i32 = arith.constant 240 : i32
    %7 = tpu.dynamic_rotate %1 by %c240_i32 dim 1 : vector<8x256xf32>, i32 -> vector<8x256xf32>
    %c24 = arith.constant 24 : index
    %c0_6 = arith.constant 0 : index
    %8 = vector.load %arg9[%c24, %c0_6] : memref<288x256xf32, #tpu.memory_space<vmem>>, vector<8x256xf32>
    tpu.vector_store %arg9[%c24, %c0_6], %7 {strides = array<i32>} : memref<288x256xf32, #tpu.memory_space<vmem>>, vector<8x256xf32>,
    %c239_i32 = arith.constant 239 : i32
    %9 = tpu.dynamic_rotate %1 by %c239_i32 dim 1 : vector<8x256xf32>, i32 -> vector<8x256xf32>
    %c32 = arith.constant 32 : index
    %c0_7 = arith.constant 0 : index
    %10 = vector.load %arg9[%c32, %c0_7] : memref<288x256xf32, #tpu.memory_space<vmem>>, vector<8x256xf32>
    tpu.vector_store %arg9[%c32, %c0_7], %9 {strides = array<i32>} : memref<288x256xf32, #tpu.memory_space<vmem>>, vector<8x256xf32>,
    %c238_i32 = arith.constant 238 : i32
    %11 = tpu.dynamic_rotate %1 by %c238_i32 dim 1 : vector<8x256xf32>, i32 -> vector<8x256xf32>
    %c40 = arith.constant 40 : index
    %c0_8 = arith.constant 0 : index
    %12 = vector.load %arg9[%c40, %c0_8] : memref<288x256xf32, #tpu.memory_space<vmem>>, vector<8x256xf32>
    tpu.vector_store %arg9[%c40, %c0_8], %11 {strides = array<i32>} : memref<288x256xf32, #tpu.memory_space<vmem>>, vector<8x256xf32>,
    %c224_i32 = arith.constant 224 : i32
    %13 = tpu.dynamic_rotate %1 by %c224_i32 dim 1 : vector<8x256xf32>, i32 -> vector<8x256xf32>
    %c48 = arith.constant 48 : index
    %c0_9 = arith.constant 0 : index
    %14 = vector.load %arg9[%c48, %c0_9] : memref<288x256xf32, #tpu.memory_space<vmem>>, vector<8x256xf32>
    tpu.vector_store %arg9[%c48, %c0_9], %13 {strides = array<i32>} : memref<288x256xf32, #tpu.memory_space<vmem>>, vector<8x256xf32>,
    %c223_i32 = arith.constant 223 : i32
    %15 = tpu.dynamic_rotate %1 by %c223_i32 dim 1 : vector<8x256xf32>, i32 -> vector<8x256xf32>
    %c56 = arith.constant 56 : index
    %c0_10 = arith.constant 0 : index
    %16 = vector.load %arg9[%c56, %c0_10] : memref<288x256xf32, #tpu.memory_space<vmem>>, vector<8x256xf32>
    tpu.vector_store %arg9[%c56, %c0_10], %15 {strides = array<i32>} : memref<288x256xf32, #tpu.memory_space<vmem>>, vector<8x256xf32>,
    %c222_i32 = arith.constant 222 : i32
    %17 = tpu.dynamic_rotate %1 by %c222_i32 dim 1 : vector<8x256xf32>, i32 -> vector<8x256xf32>
    %c64 = arith.constant 64 : index
    %c0_11 = arith.constant 0 : index
    %18 = vector.load %arg9[%c64, %c0_11] : memref<288x256xf32, #tpu.memory_space<vmem>>, vector<8x256xf32>
    tpu.vector_store %arg9[%c64, %c0_11], %17 {strides = array<i32>} : memref<288x256xf32, #tpu.memory_space<vmem>>, vector<8x256xf32>,
    %c0_12 = arith.constant 0 : index
    %c0_13 = arith.constant 0 : index
    %19 = vector.load %arg2[%c0_12, %c0_13] : memref<32x72xf32, #tpu.memory_space<vmem>>, vector<32x72xf32>
    %c0_14 = arith.constant 0 : index
    %c0_15 = arith.constant 0 : index
    %20 = vector.load %arg9[%c0_14, %c0_15] : memref<288x256xf32, #tpu.memory_space<vmem>>, vector<72x256xf32>
    %cst = arith.constant dense<0.000000e+00> : vector<32x256xf32>
    %21 = tpu.matmul %19, %20, %cst {dimension_numbers = #tpu.dot_dimension_numbers<[1], [0], [0], [1], [0, 0, 1, 1], [], []>} : vector<32x72xf32>, vector<72x256xf32>, vector<32x256xf32> -> vector<32x256xf32>
    %c0_16 = arith.constant 0 : index
    %c0_17 = arith.constant 0 : index
    %c0_18 = arith.constant 0 : index
    %22 = vector.load %arg3[%c0_16, %c0_17, %c0_18] : memref<1x32x1xf32, #tpu.memory_space<vmem>>, vector<1x32x1xf32>
    %23 = vector.shape_cast %22 : vector<1x32x1xf32> to vector<32x1xf32>
    %24 = vector.broadcast %23 : vector<32x1xf32> to vector<32x256xf32>
    %25 = arith.addf %21, %24 : vector<32x256xf32>
    %cst_19 = arith.constant 0.000000e+00 : f32
    %26 = vector.broadcast %cst_19 : f32 to vector<32x256xf32>
    %27 = arith.maximumf %25, %26 : vector<32x256xf32>
    %c0_20 = arith.constant 0 : index
    %c0_21 = arith.constant 0 : index
    %28 = vector.load %arg9[%c0_20, %c0_21] : memref<288x256xf32, #tpu.memory_space<vmem>>, vector<32x256xf32>
    tpu.vector_store %arg9[%c0_20, %c0_21], %27 {strides = array<i32>} : memref<288x256xf32, #tpu.memory_space<vmem>>, vector<32x256xf32>,
    %c255_i32_22 = arith.constant 255 : i32
    %29 = tpu.dynamic_rotate %27 by %c255_i32_22 dim 1 : vector<32x256xf32>, i32 -> vector<32x256xf32>
    %c32_23 = arith.constant 32 : index
    %c0_24 = arith.constant 0 : index
    %30 = vector.load %arg9[%c32_23, %c0_24] : memref<288x256xf32, #tpu.memory_space<vmem>>, vector<32x256xf32>
    tpu.vector_store %arg9[%c32_23, %c0_24], %29 {strides = array<i32>} : memref<288x256xf32, #tpu.memory_space<vmem>>, vector<32x256xf32>,
    %c254_i32_25 = arith.constant 254 : i32
    %31 = tpu.dynamic_rotate %27 by %c254_i32_25 dim 1 : vector<32x256xf32>, i32 -> vector<32x256xf32>
    %c64_26 = arith.constant 64 : index
    %c0_27 = arith.constant 0 : index
    %32 = vector.load %arg9[%c64_26, %c0_27] : memref<288x256xf32, #tpu.memory_space<vmem>>, vector<32x256xf32>
    tpu.vector_store %arg9[%c64_26, %c0_27], %31 {strides = array<i32>} : memref<288x256xf32, #tpu.memory_space<vmem>>, vector<32x256xf32>,
    %c240_i32_28 = arith.constant 240 : i32
    %33 = tpu.dynamic_rotate %27 by %c240_i32_28 dim 1 : vector<32x256xf32>, i32 -> vector<32x256xf32>
    %c96 = arith.constant 96 : index
    %c0_29 = arith.constant 0 : index
    %34 = vector.load %arg9[%c96, %c0_29] : memref<288x256xf32, #tpu.memory_space<vmem>>, vector<32x256xf32>
    tpu.vector_store %arg9[%c96, %c0_29], %33 {strides = array<i32>} : memref<288x256xf32, #tpu.memory_space<vmem>>, vector<32x256xf32>,
    %c239_i32_30 = arith.constant 239 : i32
    %35 = tpu.dynamic_rotate %27 by %c239_i32_30 dim 1 : vector<32x256xf32>, i32 -> vector<32x256xf32>
    %c128 = arith.constant 128 : index
    %c0_31 = arith.constant 0 : index
    %36 = vector.load %arg9[%c128, %c0_31] : memref<288x256xf32, #tpu.memory_space<vmem>>, vector<32x256xf32>
    tpu.vector_store %arg9[%c128, %c0_31], %35 {strides = array<i32>} : memref<288x256xf32, #tpu.memory_space<vmem>>, vector<32x256xf32>,
    %c238_i32_32 = arith.constant 238 : i32
    %37 = tpu.dynamic_rotate %27 by %c238_i32_32 dim 1 : vector<32x256xf32>, i32 -> vector<32x256xf32>
    %c160 = arith.constant 160 : index
    %c0_33 = arith.constant 0 : index
    %38 = vector.load %arg9[%c160, %c0_33] : memref<288x256xf32, #tpu.memory_space<vmem>>, vector<32x256xf32>
    tpu.vector_store %arg9[%c160, %c0_33], %37 {strides = array<i32>} : memref<288x256xf32, #tpu.memory_space<vmem>>, vector<32x256xf32>,
    %c224_i32_34 = arith.constant 224 : i32
    %39 = tpu.dynamic_rotate %27 by %c224_i32_34 dim 1 : vector<32x256xf32>, i32 -> vector<32x256xf32>
    %c192 = arith.constant 192 : index
    %c0_35 = arith.constant 0 : index
    %40 = vector.load %arg9[%c192, %c0_35] : memref<288x256xf32, #tpu.memory_space<vmem>>, vector<32x256xf32>
    tpu.vector_store %arg9[%c192, %c0_35], %39 {strides = array<i32>} : memref<288x256xf32, #tpu.memory_space<vmem>>, vector<32x256xf32>,
    %c223_i32_36 = arith.constant 223 : i32
    %41 = tpu.dynamic_rotate %27 by %c223_i32_36 dim 1 : vector<32x256xf32>, i32 -> vector<32x256xf32>
    %c224 = arith.constant 224 : index
    %c0_37 = arith.constant 0 : index
    %42 = vector.load %arg9[%c224, %c0_37] : memref<288x256xf32, #tpu.memory_space<vmem>>, vector<32x256xf32>
    tpu.vector_store %arg9[%c224, %c0_37], %41 {strides = array<i32>} : memref<288x256xf32, #tpu.memory_space<vmem>>, vector<32x256xf32>,
    %c222_i32_38 = arith.constant 222 : i32
    %43 = tpu.dynamic_rotate %27 by %c222_i32_38 dim 1 : vector<32x256xf32>, i32 -> vector<32x256xf32>
    %c256 = arith.constant 256 : index
    %c0_39 = arith.constant 0 : index
    %44 = vector.load %arg9[%c256, %c0_39] : memref<288x256xf32, #tpu.memory_space<vmem>>, vector<32x256xf32>
    tpu.vector_store %arg9[%c256, %c0_39], %43 {strides = array<i32>} : memref<288x256xf32, #tpu.memory_space<vmem>>, vector<32x256xf32>,
    %c0_40 = arith.constant 0 : index
    %c0_41 = arith.constant 0 : index
    %45 = vector.load %arg4[%c0_40, %c0_41] : memref<32x288xf32, #tpu.memory_space<vmem>>, vector<32x288xf32>
    %c0_42 = arith.constant 0 : index
    %c0_43 = arith.constant 0 : index
    %46 = vector.load %arg9[%c0_42, %c0_43] : memref<288x256xf32, #tpu.memory_space<vmem>>, vector<288x256xf32>
    %cst_44 = arith.constant dense<0.000000e+00> : vector<32x256xf32>
    %47 = tpu.matmul %45, %46, %cst_44 {dimension_numbers = #tpu.dot_dimension_numbers<[1], [0], [0], [1], [0, 0, 1, 1], [], []>} : vector<32x288xf32>, vector<288x256xf32>, vector<32x256xf32> -> vector<32x256xf32>
    %c0_45 = arith.constant 0 : index
    %c0_46 = arith.constant 0 : index
    %48 = vector.load %arg5[%c0_45, %c0_46] : memref<32x1xf32, #tpu.memory_space<vmem>>, vector<32x1xf32>
    %49 = vector.broadcast %48 : vector<32x1xf32> to vector<32x256xf32>
    %50 = arith.addf %47, %49 : vector<32x256xf32>
    %cst_47 = arith.constant 0.000000e+00 : f32
    %51 = vector.broadcast %cst_47 : f32 to vector<32x256xf32>
    %52 = arith.maximumf %50, %51 : vector<32x256xf32>
    %cst_48 = arith.constant 0.000000e+00 : f32
    %53 = vector.broadcast %cst_48 : f32 to vector<32x256xf32>
    %c0_49 = arith.constant 0 : index
    %c0_50 = arith.constant 0 : index
    %c0_51 = arith.constant 0 : index
    %54 = vector.load %arg6[%c0_49, %c0_50, %c0_51] : memref<9x32x1xf32, #tpu.memory_space<vmem>>, vector<1x32x1xf32>
    %55 = vector.shape_cast %54 : vector<1x32x1xf32> to vector<32x1xf32>
    %56 = vector.broadcast %55 : vector<32x1xf32> to vector<32x256xf32>
    %57 = arith.mulf %52, %56 : vector<32x256xf32>
    %58 = arith.addf %53, %57 : vector<32x256xf32>
    %c255_i32_52 = arith.constant 255 : i32
    %59 = tpu.dynamic_rotate %52 by %c255_i32_52 dim 1 : vector<32x256xf32>, i32 -> vector<32x256xf32>
    %c1 = arith.constant 1 : index
    %c0_53 = arith.constant 0 : index
    %c0_54 = arith.constant 0 : index
    %60 = vector.load %arg6[%c1, %c0_53, %c0_54] : memref<9x32x1xf32, #tpu.memory_space<vmem>>, vector<1x32x1xf32>
    %61 = vector.shape_cast %60 : vector<1x32x1xf32> to vector<32x1xf32>
    %62 = vector.broadcast %61 : vector<32x1xf32> to vector<32x256xf32>
    %63 = arith.mulf %59, %62 : vector<32x256xf32>
    %64 = arith.addf %58, %63 : vector<32x256xf32>
    %c254_i32_55 = arith.constant 254 : i32
    %65 = tpu.dynamic_rotate %52 by %c254_i32_55 dim 1 : vector<32x256xf32>, i32 -> vector<32x256xf32>
    %c2 = arith.constant 2 : index
    %c0_56 = arith.constant 0 : index
    %c0_57 = arith.constant 0 : index
    %66 = vector.load %arg6[%c2, %c0_56, %c0_57] : memref<9x32x1xf32, #tpu.memory_space<vmem>>, vector<1x32x1xf32>
    %67 = vector.shape_cast %66 : vector<1x32x1xf32> to vector<32x1xf32>
    %68 = vector.broadcast %67 : vector<32x1xf32> to vector<32x256xf32>
    %69 = arith.mulf %65, %68 : vector<32x256xf32>
    %70 = arith.addf %64, %69 : vector<32x256xf32>
    %c240_i32_58 = arith.constant 240 : i32
    %71 = tpu.dynamic_rotate %52 by %c240_i32_58 dim 1 : vector<32x256xf32>, i32 -> vector<32x256xf32>
    %c3 = arith.constant 3 : index
    %c0_59 = arith.constant 0 : index
    %c0_60 = arith.constant 0 : index
    %72 = vector.load %arg6[%c3, %c0_59, %c0_60] : memref<9x32x1xf32, #tpu.memory_space<vmem>>, vector<1x32x1xf32>
    %73 = vector.shape_cast %72 : vector<1x32x1xf32> to vector<32x1xf32>
    %74 = vector.broadcast %73 : vector<32x1xf32> to vector<32x256xf32>
    %75 = arith.mulf %71, %74 : vector<32x256xf32>
    %76 = arith.addf %70, %75 : vector<32x256xf32>
    %c239_i32_61 = arith.constant 239 : i32
    %77 = tpu.dynamic_rotate %52 by %c239_i32_61 dim 1 : vector<32x256xf32>, i32 -> vector<32x256xf32>
    %c4 = arith.constant 4 : index
    %c0_62 = arith.constant 0 : index
    %c0_63 = arith.constant 0 : index
    %78 = vector.load %arg6[%c4, %c0_62, %c0_63] : memref<9x32x1xf32, #tpu.memory_space<vmem>>, vector<1x32x1xf32>
    %79 = vector.shape_cast %78 : vector<1x32x1xf32> to vector<32x1xf32>
    %80 = vector.broadcast %79 : vector<32x1xf32> to vector<32x256xf32>
    %81 = arith.mulf %77, %80 : vector<32x256xf32>
    %82 = arith.addf %76, %81 : vector<32x256xf32>
    %c238_i32_64 = arith.constant 238 : i32
    %83 = tpu.dynamic_rotate %52 by %c238_i32_64 dim 1 : vector<32x256xf32>, i32 -> vector<32x256xf32>
    %c5 = arith.constant 5 : index
    %c0_65 = arith.constant 0 : index
    %c0_66 = arith.constant 0 : index
    %84 = vector.load %arg6[%c5, %c0_65, %c0_66] : memref<9x32x1xf32, #tpu.memory_space<vmem>>, vector<1x32x1xf32>
    %85 = vector.shape_cast %84 : vector<1x32x1xf32> to vector<32x1xf32>
    %86 = vector.broadcast %85 : vector<32x1xf32> to vector<32x256xf32>
    %87 = arith.mulf %83, %86 : vector<32x256xf32>
    %88 = arith.addf %82, %87 : vector<32x256xf32>
    %c224_i32_67 = arith.constant 224 : i32
    %89 = tpu.dynamic_rotate %52 by %c224_i32_67 dim 1 : vector<32x256xf32>, i32 -> vector<32x256xf32>
    %c6 = arith.constant 6 : index
    %c0_68 = arith.constant 0 : index
    %c0_69 = arith.constant 0 : index
    %90 = vector.load %arg6[%c6, %c0_68, %c0_69] : memref<9x32x1xf32, #tpu.memory_space<vmem>>, vector<1x32x1xf32>
    %91 = vector.shape_cast %90 : vector<1x32x1xf32> to vector<32x1xf32>
    %92 = vector.broadcast %91 : vector<32x1xf32> to vector<32x256xf32>
    %93 = arith.mulf %89, %92 : vector<32x256xf32>
    %94 = arith.addf %88, %93 : vector<32x256xf32>
    %c223_i32_70 = arith.constant 223 : i32
    %95 = tpu.dynamic_rotate %52 by %c223_i32_70 dim 1 : vector<32x256xf32>, i32 -> vector<32x256xf32>
    %c7 = arith.constant 7 : index
    %c0_71 = arith.constant 0 : index
    %c0_72 = arith.constant 0 : index
    %96 = vector.load %arg6[%c7, %c0_71, %c0_72] : memref<9x32x1xf32, #tpu.memory_space<vmem>>, vector<1x32x1xf32>
    %97 = vector.shape_cast %96 : vector<1x32x1xf32> to vector<32x1xf32>
    %98 = vector.broadcast %97 : vector<32x1xf32> to vector<32x256xf32>
    %99 = arith.mulf %95, %98 : vector<32x256xf32>
    %100 = arith.addf %94, %99 : vector<32x256xf32>
    %c222_i32_73 = arith.constant 222 : i32
    %101 = tpu.dynamic_rotate %52 by %c222_i32_73 dim 1 : vector<32x256xf32>, i32 -> vector<32x256xf32>
    %c8_74 = arith.constant 8 : index
    %c0_75 = arith.constant 0 : index
    %c0_76 = arith.constant 0 : index
    %102 = vector.load %arg6[%c8_74, %c0_75, %c0_76] : memref<9x32x1xf32, #tpu.memory_space<vmem>>, vector<1x32x1xf32>
    %103 = vector.shape_cast %102 : vector<1x32x1xf32> to vector<32x1xf32>
    %104 = vector.broadcast %103 : vector<32x1xf32> to vector<32x256xf32>
    %105 = arith.mulf %101, %104 : vector<32x256xf32>
    %106 = arith.addf %100, %105 : vector<32x256xf32>
    %cst_77 = arith.constant dense<0.000000e+00> : vector<256xf32>
    %107 = vector.multi_reduction <add>, %106, %cst_77 [0] : vector<32x256xf32> to vector<256xf32>
    %108 = vector.shape_cast %107 : vector<256xf32> to vector<1x256xf32>
    %c0_78 = arith.constant 0 : index
    %c0_79 = arith.constant 0 : index
    %109 = vector.load %arg7[%c0_78, %c0_79] : memref<1x1xf32, #tpu.memory_space<vmem>>, vector<1x1xf32>
    %110 = vector.broadcast %109 : vector<1x1xf32> to vector<1x256xf32>
    %111 = arith.addf %108, %110 : vector<1x256xf32>
    %c0_80 = arith.constant 0 : index
    %c0_81 = arith.constant 0 : index
    %c0_82 = arith.constant 0 : index
    %112 = vector.load %arg8[%c0_80, %c0_81, %c0_82] : memref<1x1x256xf32, #tpu.memory_space<vmem>>, vector<1x1x256xf32>
    %113 = vector.shape_cast %112 : vector<1x1x256xf32> to vector<1x256xf32>
    %114 = vector.shape_cast %111 : vector<1x256xf32> to vector<1x1x256xf32>
    tpu.vector_store %arg8[%c0_80, %c0_81, %c0_82], %114 {strides = array<i32>} : memref<1x1x256xf32, #tpu.memory_space<vmem>>, vector<1x1x256xf32>,
    return
  }
  func.func @transform_0(%arg0: i32) -> (i32, i32, i32) {
    %c0_i32 = arith.constant 0 : i32
    %c0_i32_0 = arith.constant 0 : i32
    %c0_i32_1 = arith.constant 0 : i32
    return %arg0, %c0_i32, %c0_i32_0 : i32, i32, i32
  }
  func.func @transform_1(%arg0: i32) -> (i32, i32) {
    %c0_i32 = arith.constant 0 : i32
    %c0_i32_0 = arith.constant 0 : i32
    %c0_i32_1 = arith.constant 0 : i32
    return %c0_i32, %c0_i32_0 : i32, i32
  }
  func.func @transform_2(%arg0: i32) -> (i32, i32, i32) {
    %c0_i32 = arith.constant 0 : i32
    %c0_i32_0 = arith.constant 0 : i32
    %c0_i32_1 = arith.constant 0 : i32
    return %arg0, %c0_i32, %c0_i32_0 : i32, i32, i32
  }
  func.func @transform_3(%arg0: i32) -> (i32, i32) {
    %c0_i32 = arith.constant 0 : i32
    %c0_i32_0 = arith.constant 0 : i32
    %c0_i32_1 = arith.constant 0 : i32
    return %c0_i32, %c0_i32_0 : i32, i32
  }
  func.func @transform_4(%arg0: i32) -> (i32, i32) {
    %c0_i32 = arith.constant 0 : i32
    %c0_i32_0 = arith.constant 0 : i32
    %c0_i32_1 = arith.constant 0 : i32
    return %c0_i32, %c0_i32_0 : i32, i32
  }
  func.func @transform_5(%arg0: i32) -> (i32, i32, i32) {
    %c0_i32 = arith.constant 0 : i32
    %c0_i32_0 = arith.constant 0 : i32
    %c0_i32_1 = arith.constant 0 : i32
    %c0_i32_2 = arith.constant 0 : i32
    return %c0_i32, %c0_i32_0, %c0_i32_1 : i32, i32, i32
  }
  func.func @transform_6(%arg0: i32) -> (i32, i32) {
    %c0_i32 = arith.constant 0 : i32
    %c0_i32_0 = arith.constant 0 : i32
    %c0_i32_1 = arith.constant 0 : i32
    return %c0_i32, %c0_i32_0 : i32, i32
  }
  func.func @transform_7(%arg0: i32) -> (i32, i32, i32) {
    %c0_i32 = arith.constant 0 : i32
    %c0_i32_0 = arith.constant 0 : i32
    %c0_i32_1 = arith.constant 0 : i32
    return %arg0, %c0_i32, %c0_i32_0 : i32, i32, i32
  }
}

</mosaic_0001>

<llo_original>
// kernel: squeeze.1
$region0: #{squeeze.1}
  %s0 = inlined_call_operand.vmem [shape: f32[2,256], index: 0, kind: input, shape index: {}]
  %s1 = inlined_call_operand.vmem [shape: f32[2,16,16], index: 1, kind: output, shape index: {}]
  $region1: #{squeeze.1} parent=0
    #allocation0 [shape = 'u8[8192]{0}', space=vmem, size = 0x2000, scoped, tag = 'scoped mem for input reshape']
    %s3 = sshllo.u32 0, 2
    %s4 = scalar_lea.vmem %s0, 2
    %v5 = vld [vmem:[%s4] sm:%s3]
    %s6 = scalar_lea.vmem [#allocation0], 8
    %7 = vst [vmem:[%s6] sm:%s3] %v5
    %v8 = vld [vmem:[%s0] sm:%s3]
    %9 = vst [vmem:[#allocation0] sm:%s3] %v8
    %v10 = vld [vmem:[#allocation0] sm:$0x3]
    %vm11 = vcmask 130048
    %12 = vst.msk [vmem:[%s1] ss:$16 sm:$0x3] %vm11, %v10
    %s13 = scalar_lea.vmem [#allocation0], 8
    %v14 = vld [vmem:[%s13] sm:$0x3]
    %vm15 = vcmask 130048
    %s16 = scalar_lea.vmem %s1, 8
    %17 = vst.msk [vmem:[%s16] ss:$16 sm:$0x3] %vm15, %v14
    %v18 = vld.sshfl [vmem:[#allocation0] sm:$0xff pattern:$0x99999180]
    %19 = vrot.lane.b32.xlu0 %v18, 112
    %v20 = vpop.permute.xlu0 %19
    %vm21 = vcmask 130048
    %s22 = scalar_lea.vmem %s1, 1
    %23 = vst.msk [vmem:[%s22] ss:$8 sm:$0xf] %vm21, %v20
    %v24 = vld.sshfl [vmem:[#allocation0] sm:$0xff pattern:$0x99999180]
    %25 = vrot.lane.b32.xlu0 %v24, 96
    %v26 = vpop.permute.xlu0 %25
    %vm27 = vcmask 130048
    %s28 = scalar_lea.vmem %s1, 2
    %29 = vst.msk [vmem:[%s28] ss:$8 sm:$0xf] %vm27, %v26
    %v30 = vld.sshfl [vmem:[#allocation0] sm:$0xff pattern:$0x99999180]
    %31 = vrot.lane.b32.xlu0 %v30, 80
    %v32 = vpop.permute.xlu0 %31
    %vm33 = vcmask 130048
    %s34 = scalar_lea.vmem %s1, 3
    %35 = vst.msk [vmem:[%s34] ss:$8 sm:$0xf] %vm33, %v32
    %v36 = vld.sshfl [vmem:[#allocation0] sm:$0xff pattern:$0x99999180]
    %37 = vrot.lane.b32.xlu0 %v36, 64
    %v38 = vpop.permute.xlu0 %37
    %vm39 = vcmask 130048
    %s40 = scalar_lea.vmem %s1, 4
    %41 = vst.msk [vmem:[%s40] ss:$8 sm:$0xf] %vm39, %v38
    %v42 = vld.sshfl [vmem:[#allocation0] sm:$0xff pattern:$0x99999180]
    %43 = vrot.lane.b32.xlu0 %v42, 48
    %v44 = vpop.permute.xlu0 %43
    %vm45 = vcmask 130048
    %s46 = scalar_lea.vmem %s1, 5
    %47 = vst.msk [vmem:[%s46] ss:$8 sm:$0xf] %vm45, %v44
    %v48 = vld.sshfl [vmem:[#allocation0] sm:$0xff pattern:$0x99999180]
    %49 = vrot.lane.b32.xlu0 %v48, 32
    %v50 = vpop.permute.xlu0 %49
    %vm51 = vcmask 130048
    %s52 = scalar_lea.vmem %s1, 6
    %53 = vst.msk [vmem:[%s52] ss:$8 sm:$0xf] %vm51, %v50
    %v54 = vld.sshfl [vmem:[#allocation0] sm:$0xff pattern:$0x99999180]
    %55 = vrot.lane.b32.xlu0 %v54, 16
    %v56 = vpop.permute.xlu0 %55
    %vm57 = vcmask 130048
    %s58 = scalar_lea.vmem %s1, 7
    %59 = vst.msk [vmem:[%s58] ss:$8 sm:$0xf] %vm57, %v56

// kernel: local_statistics_network_forward.1
$region0: #{local_statistics_network_forward.1}
  #allocation0 [shape = 'u32[]', space=smem, size = 0x4, offset = 0x4, fixed_abs, tag = 'smem constant byte address 0x4 - core index']
  #allocation1 [shape = 'u32[144,128]{1,0:T(1,128)}', space=vmem, size = 0x12000, scoped, tag = 'internal scratch']
  #allocation2 [shape = 'f32[288,256]{1,0:T(8,128)}', space=vmem, size = 0x48000, scoped, tag = 'scratch operand']
  #allocation3 [shape = 'f32[1,1]{1,0:T(1,128)S(1)}', space=vmem, size = 0x200, scoped, tag = 'scoped memory for local_statistics_network_forward.1']
  %s0 = inlined_call_operand.vmem [shape: f32[2,8,256], index: 0, kind: input, shape index: {}]
  %s1 = inlined_call_operand.vmem [shape: f32[32,72], index: 1, kind: input, shape index: {}]
  %s2 = inlined_call_operand.vmem [shape: f32[2,32,1], index: 2, kind: input, shape index: {}]
  %s3 = inlined_call_operand.vmem [shape: f32[32,288], index: 3, kind: input, shape index: {}]
  %s4 = inlined_call_operand.vmem [shape: f32[32,1], index: 4, kind: input, shape index: {}]
  %s5 = inlined_call_operand.vmem [shape: f32[9,32,1], index: 5, kind: input, shape index: {}]
  %s6 = inlined_call_operand.<no memory space> [shape: f32[1,1], index: 6, kind: input, shape index: {}]
  %s7 = inlined_call_operand.vmem [shape: f32[2,1,256], index: 7, kind: output, shape index: {}]
  %s8 = sld [smem:[#allocation0]]
  $region61: #{local_statistics_network_forward.1} parent=0
    _
  %s10 = ssub.s32 1, %s8
  %s11 = scalar_select 0, %s10, %s8
  %v12 = vstv %s6
  %13 = vst [vmem:[#allocation3] sm:$0x1] %v12
  loop: start=0, step=1, limit=4
  $region2: #{local_statistics_network_forward.1} parent=0 // loop_pre_header
    _
  $region3: #{local_statistics_network_forward.1} parent=0 // loop_header
    %s15 = sphi 0, %s19
    %p16 = scmp.ge.s32.totalorder %s15, 4
    %s25 = sphi 0, %s27
    %s28 = sphi 0, %s25
    %s29 = sphi 0, %s28
    %s45 = sphi 0, %s29
    %s49 = sphi 0, %s49
    %s51 = sphi 0, %s49
    %s52 = sphi 0, %s51
    %s66 = sphi 0, %s52
    %s72 = sphi 0, %s74
    %s75 = sphi 0, %s72
    %s76 = sphi 0, %s75
    %s92 = sphi 0, %s76
    %s96 = sphi 0, %s96
    %s98 = sphi 0, %s96
    %s99 = sphi 0, %s98
    %s113 = sphi 0, %s99
    %s117 = sphi 0, %s117
    %s119 = sphi 0, %s117
    %s120 = sphi 0, %s119
    %s134 = sphi 0, %s120
    %s138 = sphi 0, %s138
    %s140 = sphi 0, %s138
    %s141 = sphi 0, %s140
    %s155 = sphi 0, %s141
    %s159 = sphi 0, %s159
    %s161 = sphi 0, %s159
    %s162 = sphi 0, %s161
    %s176 = sphi 0, %s162
    %s182 = sphi 0, %s184
    %s185 = sphi 0, %s182
    %s186 = sphi 0, %s185
    %s202 = sphi 0, %s186
  $region4: #{local_statistics_network_forward.1} parent=0 // loop_header_branch
    %18 = sbr.rel (%p16) target = $region8
  $region5: #{local_statistics_network_forward.1} parent=0 // loop_body
    %s20 = ssub.s32 %s15, 1
    %s21 = ssub.s32 %s15, 2
    %s22 = sadd.s32 %s15, 1
    %s23 = ssub.s32 %s15, %s22
    %p24 = scmp.eq.s32.totalorder %s23, 0
    %s26 = sadd.s32 %s25, 1
    %s27 = scalar_select %p24, %s25, %s26
    %p30 = pneg %p24
    %p31 = scmp.eq.s32.totalorder %s15, 1
    %p32 = por %p30, %p31
    %p33 = scmp.ne.s32.totalorder %s25, %s28
    %p34 = scmp.eq.s32.totalorder %s15, 0
    %p35 = por %p33, %p34
    %p36 = scmp.ne.s32.totalorder %s25, %s28
    %p37 = scmp.eq.s32.totalorder %s20, 1
    %p38 = por %p36, %p37
    %p39 = scmp.ne.s32.totalorder %s28, %s29
    %p40 = scmp.eq.s32.totalorder %s20, 0
    %p41 = por %p39, %p40
    %p42 = scmp.ne.s32.totalorder %s28, %s29
    %p43 = scmp.eq.s32.totalorder %s21, 1
    %p44 = por %p42, %p43
    %p46 = scmp.ne.s32.totalorder %s29, %s45
    %p47 = scmp.eq.s32.totalorder %s21, 0
    %p48 = por %p46, %p47
    %s50 = sadd.s32 %s49, 1
    %p53 = scmp.eq.s32.totalorder %s15, 1
    %p54 = scmp.ne.s32.totalorder %s49, %s51
    %p55 = scmp.eq.s32.totalorder %s15, 0
    %p56 = por %p54, %p55
    %p57 = scmp.ne.s32.totalorder %s49, %s51
    %p58 = scmp.eq.s32.totalorder %s20, 1
    %p59 = por %p57, %p58
    %p60 = scmp.ne.s32.totalorder %s51, %s52
    %p61 = scmp.eq.s32.totalorder %s20, 0
    %p62 = por %p60, %p61
    %p63 = scmp.ne.s32.totalorder %s51, %s52
    %p64 = scmp.eq.s32.totalorder %s21, 1
    %p65 = por %p63, %p64
    %p67 = scmp.ne.s32.totalorder %s52, %s66
    %p68 = scmp.eq.s32.totalorder %s21, 0
    %p69 = por %p67, %p68
    %s70 = ssub.s32 %s15, %s22
    %p71 = scmp.eq.s32.totalorder %s70, 0
    %s73 = sadd.s32 %s72, 1
    %s74 = scalar_select %p71, %s72, %s73
    %p77 = pneg %p71
    %p78 = scmp.eq.s32.totalorder %s15, 1
    %p79 = por %p77, %p78
    %p80 = scmp.ne.s32.totalorder %s72, %s75
    %p81 = scmp.eq.s32.totalorder %s15, 0
    %p82 = por %p80, %p81
    %p83 = scmp.ne.s32.totalorder %s72, %s75
    %p84 = scmp.eq.s32.totalorder %s20, 1
    %p85 = por %p83, %p84
    %p86 = scmp.ne.s32.totalorder %s75, %s76
    %p87 = scmp.eq.s32.totalorder %s20, 0
    %p88 = por %p86, %p87
    %p89 = scmp.ne.s32.totalorder %s75, %s76
    %p90 = scmp.eq.s32.totalorder %s21, 1
    %p91 = por %p89, %p90
    %p93 = scmp.ne.s32.totalorder %s76, %s92
    %p94 = scmp.eq.s32.totalorder %s21, 0
    %p95 = por %p93, %p94
    %s97 = sadd.s32 %s96, 1
    %p100 = scmp.eq.s32.totalorder %s15, 1
    %p101 = scmp.ne.s32.totalorder %s96, %s98
    %p102 = scmp.eq.s32.totalorder %s15, 0
    %p103 = por %p101, %p102
    %p104 = scmp.ne.s32.totalorder %s96, %s98
    %p105 = scmp.eq.s32.totalorder %s20, 1
    %p106 = por %p104, %p105
    %p107 = scmp.ne.s32.totalorder %s98, %s99
    %p108 = scmp.eq.s32.totalorder %s20, 0
    %p109 = por %p107, %p108
    %p110 = scmp.ne.s32.totalorder %s98, %s99
    %p111 = scmp.eq.s32.totalorder %s21, 1
    %p112 = por %p110, %p111
    %p114 = scmp.ne.s32.totalorder %s99, %s113
    %p115 = scmp.eq.s32.totalorder %s21, 0
    %p116 = por %p114, %p115
    %s118 = sadd.s32 %s117, 1
    %p121 = scmp.eq.s32.totalorder %s15, 1
    %p122 = scmp.ne.s32.totalorder %s117, %s119
    %p123 = scmp.eq.s32.totalorder %s15, 0
    %p124 = por %p122, %p123
    %p125 = scmp.ne.s32.totalorder %s117, %s119
    %p126 = scmp.eq.s32.totalorder %s20, 1
    %p127 = por %p125, %p126
    %p128 = scmp.ne.s32.totalorder %s119, %s120
    %p129 = scmp.eq.s32.totalorder %s20, 0
    %p130 = por %p128, %p129
    %p131 = scmp.ne.s32.totalorder %s119, %s120
    %p132 = scmp.eq.s32.totalorder %s21, 1
    %p133 = por %p131, %p132
    %p135 = scmp.ne.s32.totalorder %s120, %s134
    %p136 = scmp.eq.s32.totalorder %s21, 0
    %p137 = por %p135, %p136
    %s139 = sadd.s32 %s138, 1
    %p142 = scmp.eq.s32.totalorder %s15, 1
    %p143 = scmp.ne.s32.totalorder %s138, %s140
    %p144 = scmp.eq.s32.totalorder %s15, 0
    %p145 = por %p143, %p144
    %p146 = scmp.ne.s32.totalorder %s138, %s140
    %p147 = scmp.eq.s32.totalorder %s20, 1
    %p148 = por %p146, %p147
    %p149 = scmp.ne.s32.totalorder %s140, %s141
    %p150 = scmp.eq.s32.totalorder %s20, 0
    %p151 = por %p149, %p150
    %p152 = scmp.ne.s32.totalorder %s140, %s141
    %p153 = scmp.eq.s32.totalorder %s21, 1
    %p154 = por %p152, %p153
    %p156 = scmp.ne.s32.totalorder %s141, %s155
    %p157 = scmp.eq.s32.totalorder %s21, 0
    %p158 = por %p156, %p157
    %s160 = sadd.s32 %s159, 1
    %p163 = scmp.eq.s32.totalorder %s15, 1
    %p164 = scmp.ne.s32.totalorder %s159, %s161
    %p165 = scmp.eq.s32.totalorder %s15, 0
    %p166 = por %p164, %p165
    %p167 = scmp.ne.s32.totalorder %s159, %s161
    %p168 = scmp.eq.s32.totalorder %s20, 1
    %p169 = por %p167, %p168
    %p170 = scmp.ne.s32.totalorder %s161, %s162
    %p171 = scmp.eq.s32.totalorder %s20, 0
    %p172 = por %p170, %p171
    %p173 = scmp.ne.s32.totalorder %s161, %s162
    %p174 = scmp.eq.s32.totalorder %s21, 1
    %p175 = por %p173, %p174
    %p177 = scmp.ne.s32.totalorder %s162, %s176
    %p178 = scmp.eq.s32.totalorder %s21, 0
    %p179 = por %p177, %p178
    %s180 = ssub.s32 %s15, %s22
    %p181 = scmp.eq.s32.totalorder %s180, 0
    %s183 = sadd.s32 %s182, 1
    %s184 = scalar_select %p181, %s182, %s183
    %p187 = pneg %p181
    %p188 = scmp.eq.s32.totalorder %s15, 1
    %p189 = por %p187, %p188
    %p190 = scmp.ne.s32.totalorder %s182, %s185
    %p191 = scmp.eq.s32.totalorder %s15, 0
    %p192 = por %p190, %p191
    %p193 = scmp.ne.s32.totalorder %s182, %s185
    %p194 = scmp.eq.s32.totalorder %s20, 1
    %p195 = por %p193, %p194
    %p196 = scmp.ne.s32.totalorder %s185, %s186
    %p197 = scmp.eq.s32.totalorder %s20, 0
    %p198 = por %p196, %p197
    %p199 = scmp.ne.s32.totalorder %s185, %s186
    %p200 = scmp.eq.s32.totalorder %s21, 1
    %p201 = por %p199, %p200
    %p203 = scmp.ne.s32.totalorder %s186, %s202
    %p204 = scmp.eq.s32.totalorder %s21, 0
    %p205 = por %p203, %p204
    %p206 = scmp.le.s32.totalorder 1, %s15
    %p207 = scmp.lt.s32.totalorder %s15, 3
    %p208 = pnand %p206, %p207
    %p209 = pneg %p208
    // Predicated region
    $region9: #{local_statistics_network_forward.1} parent=5 // pred_check
      _
    $region10: #{local_statistics_network_forward.1} parent=5 // pred_check_branch
      %211 = sbr.rel (%p208) target = $region12
    $region11: #{local_statistics_network_forward.1} parent=5 // pred_region
      %s212 = ssub.s32 %s15, 1
      // Predicated region
      $region13: #{local_statistics_network_forward.1} parent=11 // pred_check
        %p213 = pneg %p62
      $region14: #{local_statistics_network_forward.1} parent=11 // pred_check_branch
        %215 = sbr.rel (%p213) target = $region16
      $region15: #{local_statistics_network_forward.1} parent=11 // pred_region
        _
      $region16: #{local_statistics_network_forward.1} parent=11 // pred_fallthru
        _
      // Predicated region
      $region17: #{local_statistics_network_forward.1} parent=11 // pred_check
        %p216 = pneg %p109
      $region18: #{local_statistics_network_forward.1} parent=11 // pred_check_branch
        %218 = sbr.rel (%p216) target = $region20
      $region19: #{local_statistics_network_forward.1} parent=11 // pred_region
        _
      $region20: #{local_statistics_network_forward.1} parent=11 // pred_fallthru
        _
      // Predicated region
      $region21: #{local_statistics_network_forward.1} parent=11 // pred_check
        %p219 = pneg %p130
      $region22: #{local_statistics_network_forward.1} parent=11 // pred_check_branch
        %221 = sbr.rel (%p219) target = $region24
      $region23: #{local_statistics_network_forward.1} parent=11 // pred_region
        _
      $region24: #{local_statistics_network_forward.1} parent=11 // pred_fallthru
        _
      // Predicated region
      $region25: #{local_statistics_network_forward.1} parent=11 // pred_check
        %p222 = pneg %p151
      $region26: #{local_statistics_network_forward.1} parent=11 // pred_check_branch
        %224 = sbr.rel (%p222) target = $region28
      $region27: #{local_statistics_network_forward.1} parent=11 // pred_region
        _
      $region28: #{local_statistics_network_forward.1} parent=11 // pred_fallthru
        _
      // Predicated region
      $region29: #{local_statistics_network_forward.1} parent=11 // pred_check
        %p225 = pneg %p172
      $region30: #{local_statistics_network_forward.1} parent=11 // pred_check_branch
        %227 = sbr.rel (%p225) target = $region32
      $region31: #{local_statistics_network_forward.1} parent=11 // pred_region
        _
      $region32: #{local_statistics_network_forward.1} parent=11 // pred_fallthru
        _
    $region12: #{local_statistics_network_forward.1} parent=5 // pred_fallthru
      _
    %p228 = scmp.lt.s32.totalorder %s15, 2
    // Predicated region
    $region33: #{local_statistics_network_forward.1} parent=5 // pred_check
      %p229 = pneg %p228
    $region34: #{local_statistics_network_forward.1} parent=5 // pred_check_branch
      %231 = sbr.rel (%p229) target = $region36
    $region35: #{local_statistics_network_forward.1} parent=5 // pred_region
      // Predicated region
      $region37: #{local_statistics_network_forward.1} parent=35 // pred_check
        %p232 = pneg %p35
      $region38: #{local_statistics_network_forward.1} parent=35 // pred_check_branch
        %234 = sbr.rel (%p232) target = $region40
      $region39: #{local_statistics_network_forward.1} parent=35 // pred_region
        %p235 = scmp.lt.s32.totalorder %s15, 1
        %s236 = scalar_select %p235, %s15, 1
        %s237 = smul.addr %s236, 2
        %s238 = smul.addr %s237, 8
        %s239 = scalar_lea.vmem %s0, %s238
      $region40: #{local_statistics_network_forward.1} parent=35 // pred_fallthru
        _
      // Predicated region
      $region41: #{local_statistics_network_forward.1} parent=35 // pred_check
        %p240 = pneg %p82
      $region42: #{local_statistics_network_forward.1} parent=35 // pred_check_branch
        %242 = sbr.rel (%p240) target = $region44
      $region43: #{local_statistics_network_forward.1} parent=35 // pred_region
        %p243 = scmp.lt.s32.totalorder %s15, 1
        %s244 = scalar_select %p243, %s15, 1
        %s245 = smul.addr %s244, 4
        %s246 = smul.addr %s245, 8
        %s247 = scalar_lea.vmem %s2, %s246
      $region44: #{local_statistics_network_forward.1} parent=35 // pred_fallthru
        _
    $region36: #{local_statistics_network_forward.1} parent=5 // pred_fallthru
      _
    %p248 = scmp.le.s32.totalorder 1, %s15
    %p249 = scmp.lt.s32.totalorder %s15, 3
    %p250 = pnand %p248, %p249
    %p251 = pneg %p250
    // Predicated region
    $region45: #{local_statistics_network_forward.1} parent=5 // pred_check
      _
    $region46: #{local_statistics_network_forward.1} parent=5 // pred_check_branch
      %253 = sbr.rel (%p250) target = $region48
    $region47: #{local_statistics_network_forward.1} parent=5 // pred_region
      %s254 = ssub.s32 %s15, 1
      %p255 = scmp.lt.s32.totalorder %s20, 1
      %s256 = scalar_select %p255, %s20, 1
      %s257 = smul.addr %s256, 2
      %s258 = smul.addr %s257, 8
      %s259 = scalar_lea.vmem %s0, %s258
      %p260 = pneg %p41
      %p261 = pneg %p38
      %p262 = pneg %p62
      %p263 = pneg %p59
      %p264 = scmp.lt.s32.totalorder %s20, 1
      %s265 = scalar_select %p264, %s20, 1
      %s266 = smul.addr %s265, 4
      %s267 = smul.addr %s266, 8
      %s268 = scalar_lea.vmem %s2, %s267
      %p269 = pneg %p88
      %p270 = pneg %p85
      %p271 = pneg %p109
      %p272 = pneg %p106
      %p273 = pneg %p130
      %p274 = pneg %p127
      %p275 = pneg %p151
      %p276 = pneg %p148
      %p277 = pneg %p172
      %p278 = pneg %p169
      %p279 = pneg %p198
      %p280 = pneg %p195
      %p281 = scmp.lt.s32.totalorder %s20, 1
      %s282 = scalar_select %p281, %s20, 1
      %s283 = smul.addr %s282, 2
      %s284 = scalar_lea.vmem %s7, %s283
      %p285 = scmp.lt.s32.totalorder %s20, 1
      %s286 = scalar_select %p285, %s20, 1
      %s287 = smul.addr %s286, 2
      %s288 = smul.addr %s287, 8
      %s289 = scalar_lea.vmem %s0, %s288
      %p290 = scmp.lt.s32.totalorder %s20, 1
      %s291 = scalar_select %p290, %s20, 1
      %s292 = smul.addr %s291, 4
      %s293 = smul.addr %s292, 8
      %s294 = scalar_lea.vmem %s2, %s293
      %p295 = scmp.lt.s32.totalorder %s20, 1
      %s296 = scalar_select %p295, %s20, 1
      %s297 = smul.addr %s296, 2
      %s298 = scalar_lea.vmem %s7, %s297
      %v299 = vld [vmem:[%s289] sm:$0xff]
      %v300 = vld [vmem:[%s289 + $0x8] sm:$0xff]
      %301 = vst [vmem:[#allocation2] sm:$0xff] %v299
      %302 = vst [vmem:[#allocation2 + $0x8] sm:$0xff] %v300
      %303 = vrot.lane.b32.xlu0 %v299, 127
      %v304 = vpop.permute.xlu0 %303
      %305 = vrot.lane.b32.xlu0 %v300, 127
      %v306 = vpop.permute.xlu0 %305
      %v307 = vlaneseq
      %v308 = vand.u32 %v307, 127
      %vm309 = vcmp.lt.s32.totalorder %v308, 127
      %v310 = vsel %vm309, %v304, %v306
      %v311 = vsel %vm309, %v306, %v304
      %312 = vst [vmem:[#allocation2 + $0x10] sm:$0xff] %v310
      %313 = vst [vmem:[#allocation2 + $0x18] sm:$0xff] %v311
      %314 = vrot.lane.b32.xlu0 %v299, 126
      %v315 = vpop.permute.xlu0 %314
      %316 = vrot.lane.b32.xlu0 %v300, 126
      %v317 = vpop.permute.xlu0 %316
      %vm318 = vcmp.lt.s32.totalorder %v308, 126
      %v319 = vsel %vm318, %v315, %v317
      %v320 = vsel %vm318, %v317, %v315
      %321 = vst [vmem:[#allocation2 + $0x20] sm:$0xff] %v319
      %322 = vst [vmem:[#allocation2 + $0x28] sm:$0xff] %v320
      %323 = vrot.lane.b32.xlu0 %v299, 112
      %v324 = vpop.permute.xlu0 %323
      %325 = vrot.lane.b32.xlu0 %v300, 112
      %v326 = vpop.permute.xlu0 %325
      %vm327 = vcmp.lt.s32.totalorder %v308, 112
      %v328 = vsel %vm327, %v324, %v326
      %v329 = vsel %vm327, %v326, %v324
      %330 = vst [vmem:[#allocation2 + $0x30] sm:$0xff] %v328
      %331 = vst [vmem:[#allocation2 + $0x38] sm:$0xff] %v329
      %332 = vrot.lane.b32.xlu0 %v299, 111
      %v333 = vpop.permute.xlu0 %332
      %334 = vrot.lane.b32.xlu0 %v300, 111
      %v335 = vpop.permute.xlu0 %334
      %vm336 = vcmp.lt.s32.totalorder %v308, 111
      %v337 = vsel %vm336, %v333, %v335
      %v338 = vsel %vm336, %v335, %v333
      %339 = vst [vmem:[#allocation2 + $0x40] sm:$0xff] %v337
      %340 = vst [vmem:[#allocation2 + $0x48] sm:$0xff] %v338
      %341 = vrot.lane.b32.xlu0 %v299, 110
      %v342 = vpop.permute.xlu0 %341
      %343 = vrot.lane.b32.xlu0 %v300, 110
      %v344 = vpop.permute.xlu0 %343
      %vm345 = vcmp.lt.s32.totalorder %v308, 110
      %v346 = vsel %vm345, %v342, %v344
      %v347 = vsel %vm345, %v344, %v342
      %348 = vst [vmem:[#allocation2 + $0x50] sm:$0xff] %v346
      %349 = vst [vmem:[#allocation2 + $0x58] sm:$0xff] %v347
      %350 = vrot.lane.b32.xlu0 %v299, 96
      %v351 = vpop.permute.xlu0 %350
      %352 = vrot.lane.b32.xlu0 %v300, 96
      %v353 = vpop.permute.xlu0 %352
      %vm354 = vcmp.lt.s32.totalorder %v308, 96
      %v355 = vsel %vm354, %v351, %v353
      %v356 = vsel %vm354, %v353, %v351
      %357 = vst [vmem:[#allocation2 + $0x60] sm:$0xff] %v355
      %358 = vst [vmem:[#allocation2 + $0x68] sm:$0xff] %v356
      %359 = vrot.lane.b32.xlu0 %v299, 95
      %v360 = vpop.permute.xlu0 %359
      %361 = vrot.lane.b32.xlu0 %v300, 95
      %v362 = vpop.permute.xlu0 %361
      %vm363 = vcmp.lt.s32.totalorder %v308, 95
      %v364 = vsel %vm363, %v360, %v362
      %v365 = vsel %vm363, %v362, %v360
      %366 = vst [vmem:[#allocation2 + $0x70] sm:$0xff] %v364
      %367 = vst [vmem:[#allocation2 + $0x78] sm:$0xff] %v365
      %368 = vrot.lane.b32.xlu0 %v299, 94
      %v369 = vpop.permute.xlu0 %368
      %370 = vrot.lane.b32.xlu0 %v300, 94
      %v371 = vpop.permute.xlu0 %370
      %vm372 = vcmp.lt.s32.totalorder %v308, 94
      %v373 = vsel %vm372, %v369, %v371
      %v374 = vsel %vm372, %v371, %v369
      %375 = vst [vmem:[#allocation2 + $0x80] sm:$0xff] %v373
      %376 = vst [vmem:[#allocation2 + $0x88] sm:$0xff] %v374
      %v377 = vld [vmem:[%s1] sm:$0xff]
      %v378 = vld [vmem:[%s1 + $0x8] sm:$0xff]
      %v379 = vld [vmem:[%s1 + $0x10] sm:$0xff]
      %v380 = vld [vmem:[%s1 + $0x18] sm:$0xff]
      %v381 = vld [vmem:[#allocation2] sm:$0xff]
      %v382 = vld [vmem:[#allocation2 + $0x8] sm:$0xff]
      %v383 = vld [vmem:[#allocation2 + $0x10] sm:$0xff]
      %v384 = vld [vmem:[#allocation2 + $0x18] sm:$0xff]
      %v385 = vld [vmem:[#allocation2 + $0x20] sm:$0xff]
      %v386 = vld [vmem:[#allocation2 + $0x28] sm:$0xff]
      %v387 = vld [vmem:[#allocation2 + $0x30] sm:$0xff]
      %v388 = vld [vmem:[#allocation2 + $0x38] sm:$0xff]
      %v389 = vld [vmem:[#allocation2 + $0x40] sm:$0xff]
      %v390 = vld [vmem:[#allocation2 + $0x48] sm:$0xff]
      %v391 = vld [vmem:[#allocation2 + $0x50] sm:$0xff]
      %v392 = vld [vmem:[#allocation2 + $0x58] sm:$0xff]
      %v393 = vld [vmem:[#allocation2 + $0x60] sm:$0xff]
      %v394 = vld [vmem:[#allocation2 + $0x68] sm:$0xff]
      %v395 = vld [vmem:[#allocation2 + $0x70] sm:$0xff]
      %v396 = vld [vmem:[#allocation2 + $0x78] sm:$0xff]
      %v397 = vld [vmem:[#allocation2 + $0x80] sm:$0xff]
      %v398 = vld [vmem:[#allocation2 + $0x88] sm:$0xff]
      %v399 = vld [vmem:[%s294] sm:$0xff]
      %v400 = vld [vmem:[%s294 + $0x8] sm:$0xff]
      %v401 = vld [vmem:[%s294 + $0x10] sm:$0xff]
      %v402 = vld [vmem:[%s294 + $0x18] sm:$0xff]
      %404 = vset.pattern.permute.xlu0 0
      %405 = vperm.xlu0 %404, %v399
      %v406 = vpop.permute.xlu0 %405
      %409 = vset.pattern.permute.xlu0 0
      %410 = vperm.xlu0 %409, %v400
      %v411 = vpop.permute.xlu0 %410
      %414 = vset.pattern.permute.xlu0 0
      %415 = vperm.xlu0 %414, %v401
      %v416 = vpop.permute.xlu0 %415
      %419 = vset.pattern.permute.xlu0 0
      %420 = vperm.xlu0 %419, %v402
      %v421 = vpop.permute.xlu0 %420
      %vm423 = vcmask 588800
      %v425 = vsel %vm423, %v377, 0
      %v428 = vsel %vm423, %v378, 0
      %v431 = vsel %vm423, %v379, 0
      %v434 = vsel %vm423, %v380, 0
      %436 = vmatprep.subr.mxu0 %v382
      %437 = vmatpush1.msra.mxu0 %v381
      %438 = vmatprep.subr.mxu0 %v384
      %439 = vmatpush1.msra.mxu0 %v383
      %440 = vmatprep.subr.mxu0 %v386
      %441 = vmatpush1.msra.mxu0 %v385
      %442 = vmatprep.subr.mxu0 %v388
      %443 = vmatpush1.msra.mxu0 %v387
      %444 = vmatprep.subr.mxu0 %v390
      %445 = vmatpush1.msra.mxu0 %v389
      %446 = vmatprep.subr.mxu0 %v392
      %447 = vmatpush1.msra.mxu0 %v391
      %448 = vmatprep.subr.mxu0 %v394
      %449 = vmatpush1.msra.mxu0 %v393
      %450 = vmatprep.subr.mxu0 %v396
      %451 = vmatpush1.msra.mxu0 %v395
      %452 = vmatprep.subr.mxu0 %v398
      %453 = vmatpush1.msra.mxu0 %v397
      %454 = vmatprep.subr.mxu0 0.0
      %455 = vmatpush1.msra.mxu0 0.0
      %456 = vmatprep.subr.mxu0 0.0
      %457 = vmatpush1.msra.mxu0 0.0
      %458 = vmatprep.subr.mxu0 0.0
      %459 = vmatpush1.msra.mxu0 0.0
      %460 = vmatprep.subr.mxu0 0.0
      %461 = vmatpush1.msra.mxu0 0.0
      %462 = vmatprep.subr.mxu0 0.0
      %463 = vmatpush1.msra.mxu0 0.0
      %464 = vmatprep.subr.mxu0 0.0
      %465 = vmatpush1.msra.mxu0 0.0
      %466 = vmatprep.subr.mxu0 0.0
      %467 = vmatpush1.msra.mxu0 0.0
      %468 = vmatprep.subr.mxu0 0.0
      %469 = vmatpush1.msra.mxu0 0.0
      %470 = vmatprep.subr.mxu0 0.0
      %471 = vmatpush1.msra.mxu0 0.0
      %472 = vmatprep.subr.mxu0 0.0
      %473 = vmatpush1.msra.mxu0 0.0
      %474 = vmatprep.subr.mxu0 0.0
      %475 = vmatpush1.msra.mxu0 0.0
      %476 = vmatprep.subr.mxu0 0.0
      %477 = vmatpush1.msra.mxu0 0.0
      %478 = vmatprep.subr.mxu0 0.0
      %479 = vmatpush1.msra.mxu0 0.0
      %480 = vmatprep.subr.mxu0 0.0
      %481 = vmatpush1.msra.mxu0 0.0
      %482 = vmatprep.subr.mxu0 0.0
      %483 = vmatpush1.msra.mxu0 0.0
      %484 = vmatprep.subr.mxu0 0.0
      %485 = vmatpush1.msra.mxu0 0.0
      %486 = vmatprep.subr.mxu0 0.0
      %487 = vmatpush1.msra.mxu0 0.0
      %488 = vmatprep.subr.mxu0 0.0
      %489 = vmatpush1.msra.mxu0 0.0
      %490 = vmatprep.subr.mxu0 0.0
      %491 = vmatpush1.msra.mxu0 0.0
      %492 = vmatprep.subr.mxu0 0.0
      %493 = vmatpush1.msra.mxu0 0.0
      %494 = vmatprep.subr.mxu0 0.0
      %495 = vmatpush1.msra.mxu0 0.0
      %496 = vmatprep.subr.mxu0 0.0
      %497 = vmatpush1.msra.mxu0 0.0
      %498 = vmatprep.subr.mxu0 0.0
      %499 = vmatpush1.msra.mxu0 0.0
      %500 = vmatprep.mubr.f32.mxu0 0.0
      %501 = vmatmul.mubr.f32.gmra.mrb[0].mxu0 %v425
      %v502 = vpop.f32.mrb[0].mxu0
      %v503 = vadd.f32 %v406, %v502
      %v504 = vpop.f32.mrb[0].mxu0
      %v505 = vadd.f32 %v406, %v504
      %506 = vmatprep.mubr.f32.mxu0 0.0
      %507 = vmatmul.mubr.f32.gmra.mrb[0].mxu0 %v428
      %v508 = vpop.f32.mrb[0].mxu0
      %v509 = vadd.f32 %v411, %v508
      %v510 = vpop.f32.mrb[0].mxu0
      %v511 = vadd.f32 %v411, %v510
      %512 = vmatprep.mubr.f32.mxu0 0.0
      %513 = vmatmul.mubr.f32.gmra.mrb[0].mxu0 %v431
      %v514 = vpop.f32.mrb[0].mxu0
      %v515 = vadd.f32 %v416, %v514
      %v516 = vpop.f32.mrb[0].mxu0
      %v517 = vadd.f32 %v416, %v516
      %518 = vmatprep.mubr.f32.mxu0 0.0
      %519 = vmatmul.mubr.f32.gmra.mrb[0].mxu0 %v434
      %v520 = vpop.f32.mrb[0].mxu0
      %v521 = vadd.f32 %v421, %v520
      %v522 = vpop.f32.mrb[0].mxu0
      %v523 = vadd.f32 %v421, %v522
      %524 = vdwg.mxu0
      %v525 = vmax.f32 %v503, 0.0
      %v526 = vmax.f32 %v505, 0.0
      %v527 = vmax.f32 %v509, 0.0
      %v528 = vmax.f32 %v511, 0.0
      %v529 = vmax.f32 %v515, 0.0
      %v530 = vmax.f32 %v517, 0.0
      %v531 = vmax.f32 %v521, 0.0
      %v532 = vmax.f32 %v523, 0.0
      %533 = vst [vmem:[#allocation2] sm:$0xff] %v525
      %534 = vst [vmem:[#allocation2 + $0x8] sm:$0xff] %v526
      %535 = vst [vmem:[#allocation2 + $0x10] sm:$0xff] %v527
      %536 = vst [vmem:[#allocation2 + $0x18] sm:$0xff] %v528
      %537 = vst [vmem:[#allocation2 + $0x20] sm:$0xff] %v529
      %538 = vst [vmem:[#allocation2 + $0x28] sm:$0xff] %v530
      %539 = vst [vmem:[#allocation2 + $0x30] sm:$0xff] %v531
      %540 = vst [vmem:[#allocation2 + $0x38] sm:$0xff] %v532
      %541 = vrot.lane.b32.xlu0 %v525, 127
      %v542 = vpop.permute.xlu0 %541
      %543 = vrot.lane.b32.xlu0 %v527, 127
      %v544 = vpop.permute.xlu0 %543
      %545 = vrot.lane.b32.xlu0 %v529, 127
      %v546 = vpop.permute.xlu0 %545
      %547 = vrot.lane.b32.xlu0 %v531, 127
      %v548 = vpop.permute.xlu0 %547
      %549 = vrot.lane.b32.xlu0 %v526, 127
      %v550 = vpop.permute.xlu0 %549
      %551 = vrot.lane.b32.xlu0 %v528, 127
      %v552 = vpop.permute.xlu0 %551
      %553 = vrot.lane.b32.xlu0 %v530, 127
      %v554 = vpop.permute.xlu0 %553
      %555 = vrot.lane.b32.xlu0 %v532, 127
      %v556 = vpop.permute.xlu0 %555
      %v557 = vsel %vm309, %v542, %v550
      %v558 = vsel %vm309, %v544, %v552
      %v559 = vsel %vm309, %v546, %v554
      %v560 = vsel %vm309, %v548, %v556
      %v561 = vsel %vm309, %v550, %v542
      %v562 = vsel %vm309, %v552, %v544
      %v563 = vsel %vm309, %v554, %v546
      %v564 = vsel %vm309, %v556, %v548
      %565 = vst [vmem:[#allocation2 + $0x40] sm:$0xff] %v557
      %566 = vst [vmem:[#allocation2 + $0x48] sm:$0xff] %v561
      %567 = vst [vmem:[#allocation2 + $0x50] sm:$0xff] %v558
      %568 = vst [vmem:[#allocation2 + $0x58] sm:$0xff] %v562
      %569 = vst [vmem:[#allocation2 + $0x60] sm:$0xff] %v559
      %570 = vst [vmem:[#allocation2 + $0x68] sm:$0xff] %v563
      %571 = vst [vmem:[#allocation2 + $0x70] sm:$0xff] %v560
      %572 = vst [vmem:[#allocation2 + $0x78] sm:$0xff] %v564
      %573 = vrot.lane.b32.xlu0 %v525, 126
      %v574 = vpop.permute.xlu0 %573
      %575 = vrot.lane.b32.xlu0 %v527, 126
      %v576 = vpop.permute.xlu0 %575
      %577 = vrot.lane.b32.xlu0 %v529, 126
      %v578 = vpop.permute.xlu0 %577
      %579 = vrot.lane.b32.xlu0 %v531, 126
      %v580 = vpop.permute.xlu0 %579
      %581 = vrot.lane.b32.xlu0 %v526, 126
      %v582 = vpop.permute.xlu0 %581
      %583 = vrot.lane.b32.xlu0 %v528, 126
      %v584 = vpop.permute.xlu0 %583
      %585 = vrot.lane.b32.xlu0 %v530, 126
      %v586 = vpop.permute.xlu0 %585
      %587 = vrot.lane.b32.xlu0 %v532, 126
      %v588 = vpop.permute.xlu0 %587
      %v589 = vsel %vm318, %v574, %v582
      %v590 = vsel %vm318, %v576, %v584
      %v591 = vsel %vm318, %v578, %v586
      %v592 = vsel %vm318, %v580, %v588
      %v593 = vsel %vm318, %v582, %v574
      %v594 = vsel %vm318, %v584, %v576
      %v595 = vsel %vm318, %v586, %v578
      %v596 = vsel %vm318, %v588, %v580
      %597 = vst [vmem:[#allocation2 + $0x80] sm:$0xff] %v589
      %598 = vst [vmem:[#allocation2 + $0x88] sm:$0xff] %v593
      %599 = vst [vmem:[#allocation2 + $0x90] sm:$0xff] %v590
      %600 = vst [vmem:[#allocation2 + $0x98] sm:$0xff] %v594
      %601 = vst [vmem:[#allocation2 + $0xa0] sm:$0xff] %v591
      %602 = vst [vmem:[#allocation2 + $0xa8] sm:$0xff] %v595
      %603 = vst [vmem:[#allocation2 + $0xb0] sm:$0xff] %v592
      %604 = vst [vmem:[#allocation2 + $0xb8] sm:$0xff] %v596
      %605 = vrot.lane.b32.xlu0 %v525, 112
      %v606 = vpop.permute.xlu0 %605
      %607 = vrot.lane.b32.xlu0 %v527, 112
      %v608 = vpop.permute.xlu0 %607
      %609 = vrot.lane.b32.xlu0 %v529, 112
      %v610 = vpop.permute.xlu0 %609
      %611 = vrot.lane.b32.xlu0 %v531, 112
      %v612 = vpop.permute.xlu0 %611
      %613 = vrot.lane.b32.xlu0 %v526, 112
      %v614 = vpop.permute.xlu0 %613
      %615 = vrot.lane.b32.xlu0 %v528, 112
      %v616 = vpop.permute.xlu0 %615
      %617 = vrot.lane.b32.xlu0 %v530, 112
      %v618 = vpop.permute.xlu0 %617
      %619 = vrot.lane.b32.xlu0 %v532, 112
      %v620 = vpop.permute.xlu0 %619
      %v621 = vsel %vm327, %v606, %v614
      %v622 = vsel %vm327, %v608, %v616
      %v623 = vsel %vm327, %v610, %v618
      %v624 = vsel %vm327, %v612, %v620
      %v625 = vsel %vm327, %v614, %v606
      %v626 = vsel %vm327, %v616, %v608
      %v627 = vsel %vm327, %v618, %v610
      %v628 = vsel %vm327, %v620, %v612
      %629 = vst [vmem:[#allocation2 + $0xc0] sm:$0xff] %v621
      %630 = vst [vmem:[#allocation2 + $0xc8] sm:$0xff] %v625
      %631 = vst [vmem:[#allocation2 + $0xd0] sm:$0xff] %v622
      %632 = vst [vmem:[#allocation2 + $0xd8] sm:$0xff] %v626
      %633 = vst [vmem:[#allocation2 + $0xe0] sm:$0xff] %v623
      %634 = vst [vmem:[#allocation2 + $0xe8] sm:$0xff] %v627
      %635 = vst [vmem:[#allocation2 + $0xf0] sm:$0xff] %v624
      %636 = vst [vmem:[#allocation2 + $0xf8] sm:$0xff] %v628
      %637 = vrot.lane.b32.xlu0 %v525, 111
      %v638 = vpop.permute.xlu0 %637
      %639 = vrot.lane.b32.xlu0 %v527, 111
      %v640 = vpop.permute.xlu0 %639
      %641 = vrot.lane.b32.xlu0 %v529, 111
      %v642 = vpop.permute.xlu0 %641
      %643 = vrot.lane.b32.xlu0 %v531, 111
      %v644 = vpop.permute.xlu0 %643
      %645 = vrot.lane.b32.xlu0 %v526, 111
      %v646 = vpop.permute.xlu0 %645
      %647 = vrot.lane.b32.xlu0 %v528, 111
      %v648 = vpop.permute.xlu0 %647
      %649 = vrot.lane.b32.xlu0 %v530, 111
      %v650 = vpop.permute.xlu0 %649
      %651 = vrot.lane.b32.xlu0 %v532, 111
      %v652 = vpop.permute.xlu0 %651
      %v653 = vsel %vm336, %v638, %v646
      %v654 = vsel %vm336, %v640, %v648
      %v655 = vsel %vm336, %v642, %v650
      %v656 = vsel %vm336, %v644, %v652
      %v657 = vsel %vm336, %v646, %v638
      %v658 = vsel %vm336, %v648, %v640
      %v659 = vsel %vm336, %v650, %v642
      %v660 = vsel %vm336, %v652, %v644
      %661 = vst [vmem:[#allocation2 + $0x100] sm:$0xff] %v653
      %662 = vst [vmem:[#allocation2 + $0x108] sm:$0xff] %v657
      %663 = vst [vmem:[#allocation2 + $0x110] sm:$0xff] %v654
      %664 = vst [vmem:[#allocation2 + $0x118] sm:$0xff] %v658
      %665 = vst [vmem:[#allocation2 + $0x120] sm:$0xff] %v655
      %666 = vst [vmem:[#allocation2 + $0x128] sm:$0xff] %v659
      %667 = vst [vmem:[#allocation2 + $0x130] sm:$0xff] %v656
      %668 = vst [vmem:[#allocation2 + $0x138] sm:$0xff] %v660
      %669 = vrot.lane.b32.xlu0 %v525, 110
      %v670 = vpop.permute.xlu0 %669
      %671 = vrot.lane.b32.xlu0 %v527, 110
      %v672 = vpop.permute.xlu0 %671
      %673 = vrot.lane.b32.xlu0 %v529, 110
      %v674 = vpop.permute.xlu0 %673
      %675 = vrot.lane.b32.xlu0 %v531, 110
      %v676 = vpop.permute.xlu0 %675
      %677 = vrot.lane.b32.xlu0 %v526, 110
      %v678 = vpop.permute.xlu0 %677
      %679 = vrot.lane.b32.xlu0 %v528, 110
      %v680 = vpop.permute.xlu0 %679
      %681 = vrot.lane.b32.xlu0 %v530, 110
      %v682 = vpop.permute.xlu0 %681
      %683 = vrot.lane.b32.xlu0 %v532, 110
      %v684 = vpop.permute.xlu0 %683
      %v685 = vsel %vm345, %v670, %v678
      %v686 = vsel %vm345, %v672, %v680
      %v687 = vsel %vm345, %v674, %v682
      %v688 = vsel %vm345, %v676, %v684
      %v689 = vsel %vm345, %v678, %v670
      %v690 = vsel %vm345, %v680, %v672
      %v691 = vsel %vm345, %v682, %v674
      %v692 = vsel %vm345, %v684, %v676
      %693 = vst [vmem:[#allocation2 + $0x140] sm:$0xff] %v685
      %694 = vst [vmem:[#allocation2 + $0x148] sm:$0xff] %v689
      %695 = vst [vmem:[#allocation2 + $0x150] sm:$0xff] %v686
      %696 = vst [vmem:[#allocation2 + $0x158] sm:$0xff] %v690
      %697 = vst [vmem:[#allocation2 + $0x160] sm:$0xff] %v687
      %698 = vst [vmem:[#allocation2 + $0x168] sm:$0xff] %v691
      %699 = vst [vmem:[#allocation2 + $0x170] sm:$0xff] %v688
      %700 = vst [vmem:[#allocation2 + $0x178] sm:$0xff] %v692
      %701 = vrot.lane.b32.xlu0 %v525, 96
      %v702 = vpop.permute.xlu0 %701
      %703 = vrot.lane.b32.xlu0 %v527, 96
      %v704 = vpop.permute.xlu0 %703
      %705 = vrot.lane.b32.xlu0 %v529, 96
      %v706 = vpop.permute.xlu0 %705
      %707 = vrot.lane.b32.xlu0 %v531, 96
      %v708 = vpop.permute.xlu0 %707
      %709 = vrot.lane.b32.xlu0 %v526, 96
      %v710 = vpop.permute.xlu0 %709
      %711 = vrot.lane.b32.xlu0 %v528, 96
      %v712 = vpop.permute.xlu0 %711
      %713 = vrot.lane.b32.xlu0 %v530, 96
      %v714 = vpop.permute.xlu0 %713
      %715 = vrot.lane.b32.xlu0 %v532, 96
      %v716 = vpop.permute.xlu0 %715
      %v717 = vsel %vm354, %v702, %v710
      %v718 = vsel %vm354, %v704, %v712
      %v719 = vsel %vm354, %v706, %v714
      %v720 = vsel %vm354, %v708, %v716
      %v721 = vsel %vm354, %v710, %v702
      %v722 = vsel %vm354, %v712, %v704
      %v723 = vsel %vm354, %v714, %v706
      %v724 = vsel %vm354, %v716, %v708
      %725 = vst [vmem:[#allocation2 + $0x180] sm:$0xff] %v717
      %726 = vst [vmem:[#allocation2 + $0x188] sm:$0xff] %v721
      %727 = vst [vmem:[#allocation2 + $0x190] sm:$0xff] %v718
      %728 = vst [vmem:[#allocation2 + $0x198] sm:$0xff] %v722
      %729 = vst [vmem:[#allocation2 + $0x1a0] sm:$0xff] %v719
      %730 = vst [vmem:[#allocation2 + $0x1a8] sm:$0xff] %v723
      %731 = vst [vmem:[#allocation2 + $0x1b0] sm:$0xff] %v720
      %732 = vst [vmem:[#allocation2 + $0x1b8] sm:$0xff] %v724
      %733 = vrot.lane.b32.xlu0 %v525, 95
      %v734 = vpop.permute.xlu0 %733
      %735 = vrot.lane.b32.xlu0 %v527, 95
      %v736 = vpop.permute.xlu0 %735
      %737 = vrot.lane.b32.xlu0 %v529, 95
      %v738 = vpop.permute.xlu0 %737
      %739 = vrot.lane.b32.xlu0 %v531, 95
      %v740 = vpop.permute.xlu0 %739
      %741 = vrot.lane.b32.xlu0 %v526, 95
      %v742 = vpop.permute.xlu0 %741
      %743 = vrot.lane.b32.xlu0 %v528, 95
      %v744 = vpop.permute.xlu0 %743
      %745 = vrot.lane.b32.xlu0 %v530, 95
      %v746 = vpop.permute.xlu0 %745
      %747 = vrot.lane.b32.xlu0 %v532, 95
      %v748 = vpop.permute.xlu0 %747
      %v749 = vsel %vm363, %v734, %v742
      %v750 = vsel %vm363, %v736, %v744
      %v751 = vsel %vm363, %v738, %v746
      %v752 = vsel %vm363, %v740, %v748
      %v753 = vsel %vm363, %v742, %v734
      %v754 = vsel %vm363, %v744, %v736
      %v755 = vsel %vm363, %v746, %v738
      %v756 = vsel %vm363, %v748, %v740
      %757 = vst [vmem:[#allocation2 + $0x1c0] sm:$0xff] %v749
      %758 = vst [vmem:[#allocation2 + $0x1c8] sm:$0xff] %v753
      %759 = vst [vmem:[#allocation2 + $0x1d0] sm:$0xff] %v750
      %760 = vst [vmem:[#allocation2 + $0x1d8] sm:$0xff] %v754
      %761 = vst [vmem:[#allocation2 + $0x1e0] sm:$0xff] %v751
      %762 = vst [vmem:[#allocation2 + $0x1e8] sm:$0xff] %v755
      %763 = vst [vmem:[#allocation2 + $0x1f0] sm:$0xff] %v752
      %764 = vst [vmem:[#allocation2 + $0x1f8] sm:$0xff] %v756
      %765 = vrot.lane.b32.xlu0 %v525, 94
      %v766 = vpop.permute.xlu0 %765
      %767 = vrot.lane.b32.xlu0 %v527, 94
      %v768 = vpop.permute.xlu0 %767
      %769 = vrot.lane.b32.xlu0 %v529, 94
      %v770 = vpop.permute.xlu0 %769
      %771 = vrot.lane.b32.xlu0 %v531, 94
      %v772 = vpop.permute.xlu0 %771
      %773 = vrot.lane.b32.xlu0 %v526, 94
      %v774 = vpop.permute.xlu0 %773
      %775 = vrot.lane.b32.xlu0 %v528, 94
      %v776 = vpop.permute.xlu0 %775
      %777 = vrot.lane.b32.xlu0 %v530, 94
      %v778 = vpop.permute.xlu0 %777
      %779 = vrot.lane.b32.xlu0 %v532, 94
      %v780 = vpop.permute.xlu0 %779
      %v781 = vsel %vm372, %v766, %v774
      %v782 = vsel %vm372, %v768, %v776
      %v783 = vsel %vm372, %v770, %v778
      %v784 = vsel %vm372, %v772, %v780
      %v785 = vsel %vm372, %v774, %v766
      %v786 = vsel %vm372, %v776, %v768
      %v787 = vsel %vm372, %v778, %v770
      %v788 = vsel %vm372, %v780, %v772
      %789 = vst [vmem:[#allocation2 + $0x200] sm:$0xff] %v781
      %790 = vst [vmem:[#allocation2 + $0x208] sm:$0xff] %v785
      %791 = vst [vmem:[#allocation2 + $0x210] sm:$0xff] %v782
      %792 = vst [vmem:[#allocation2 + $0x218] sm:$0xff] %v786
      %793 = vst [vmem:[#allocation2 + $0x220] sm:$0xff] %v783
      %794 = vst [vmem:[#allocation2 + $0x228] sm:$0xff] %v787
      %795 = vst [vmem:[#allocation2 + $0x230] sm:$0xff] %v784
      %796 = vst [vmem:[#allocation2 + $0x238] sm:$0xff] %v788
      %v797 = vld [vmem:[%s3] sm:$0xff]
      %v798 = vld [vmem:[%s3 + $0x8] sm:$0xff]
      %v799 = vld [vmem:[%s3 + $0x10] sm:$0xff]
      %v800 = vld [vmem:[%s3 + $0x18] sm:$0xff]
      %v801 = vld [vmem:[%s3 + $0x20] sm:$0xff]
      %v802 = vld [vmem:[%s3 + $0x28] sm:$0xff]
      %v803 = vld [vmem:[%s3 + $0x30] sm:$0xff]
      %v804 = vld [vmem:[%s3 + $0x38] sm:$0xff]
      %v805 = vld [vmem:[%s3 + $0x40] sm:$0xff]
      %v806 = vld [vmem:[%s3 + $0x48] sm:$0xff]
      %v807 = vld [vmem:[%s3 + $0x50] sm:$0xff]
      %v808 = vld [vmem:[%s3 + $0x58] sm:$0xff]
      %v809 = vld [vmem:[#allocation2] sm:$0xff]
      %v810 = vld [vmem:[#allocation2 + $0x8] sm:$0xff]
      %v811 = vld [vmem:[#allocation2 + $0x10] sm:$0xff]
      %v812 = vld [vmem:[#allocation2 + $0x18] sm:$0xff]
      %v813 = vld [vmem:[#allocation2 + $0x20] sm:$0xff]
      %v814 = vld [vmem:[#allocation2 + $0x28] sm:$0xff]
      %v815 = vld [vmem:[#allocation2 + $0x30] sm:$0xff]
      %v816 = vld [vmem:[#allocation2 + $0x38] sm:$0xff]
      %v817 = vld [vmem:[#allocation2 + $0x40] sm:$0xff]
      %v818 = vld [vmem:[#allocation2 + $0x48] sm:$0xff]
      %v819 = vld [vmem:[#allocation2 + $0x50] sm:$0xff]
      %v820 = vld [vmem:[#allocation2 + $0x58] sm:$0xff]
      %v821 = vld [vmem:[#allocation2 + $0x60] sm:$0xff]
      %v822 = vld [vmem:[#allocation2 + $0x68] sm:$0xff]
      %v823 = vld [vmem:[#allocation2 + $0x70] sm:$0xff]
      %v824 = vld [vmem:[#allocation2 + $0x78] sm:$0xff]
      %v825 = vld [vmem:[#allocation2 + $0x80] sm:$0xff]
      %v826 = vld [vmem:[#allocation2 + $0x88] sm:$0xff]
      %v827 = vld [vmem:[#allocation2 + $0x90] sm:$0xff]
      %v828 = vld [vmem:[#allocation2 + $0x98] sm:$0xff]
      %v829 = vld [vmem:[#allocation2 + $0xa0] sm:$0xff]
      %v830 = vld [vmem:[#allocation2 + $0xa8] sm:$0xff]
      %v831 = vld [vmem:[#allocation2 + $0xb0] sm:$0xff]
      %v832 = vld [vmem:[#allocation2 + $0xb8] sm:$0xff]
      %v833 = vld [vmem:[#allocation2 + $0xc0] sm:$0xff]
      %v834 = vld [vmem:[#allocation2 + $0xc8] sm:$0xff]
      %v835 = vld [vmem:[#allocation2 + $0xd0] sm:$0xff]
      %v836 = vld [vmem:[#allocation2 + $0xd8] sm:$0xff]
      %v837 = vld [vmem:[#allocation2 + $0xe0] sm:$0xff]
      %v838 = vld [vmem:[#allocation2 + $0xe8] sm:$0xff]
      %v839 = vld [vmem:[#allocation2 + $0xf0] sm:$0xff]
      %v840 = vld [vmem:[#allocation2 + $0xf8] sm:$0xff]
      %v841 = vld [vmem:[#allocation2 + $0x100] sm:$0xff]
      %v842 = vld [vmem:[#allocation2 + $0x108] sm:$0xff]
      %v843 = vld [vmem:[#allocation2 + $0x110] sm:$0xff]
      %v844 = vld [vmem:[#allocation2 + $0x118] sm:$0xff]
      %v845 = vld [vmem:[#allocation2 + $0x120] sm:$0xff]
      %v846 = vld [vmem:[#allocation2 + $0x128] sm:$0xff]
      %v847 = vld [vmem:[#allocation2 + $0x130] sm:$0xff]
      %v848 = vld [vmem:[#allocation2 + $0x138] sm:$0xff]
      %v849 = vld [vmem:[#allocation2 + $0x140] sm:$0xff]
      %v850 = vld [vmem:[#allocation2 + $0x148] sm:$0xff]
      %v851 = vld [vmem:[#allocation2 + $0x150] sm:$0xff]
      %v852 = vld [vmem:[#allocation2 + $0x158] sm:$0xff]
      %v853 = vld [vmem:[#allocation2 + $0x160] sm:$0xff]
      %v854 = vld [vmem:[#allocation2 + $0x168] sm:$0xff]
      %v855 = vld [vmem:[#allocation2 + $0x170] sm:$0xff]
      %v856 = vld [vmem:[#allocation2 + $0x178] sm:$0xff]
      %v857 = vld [vmem:[#allocation2 + $0x180] sm:$0xff]
      %v858 = vld [vmem:[#allocation2 + $0x188] sm:$0xff]
      %v859 = vld [vmem:[#allocation2 + $0x190] sm:$0xff]
      %v860 = vld [vmem:[#allocation2 + $0x198] sm:$0xff]
      %v861 = vld [vmem:[#allocation2 + $0x1a0] sm:$0xff]
      %v862 = vld [vmem:[#allocation2 + $0x1a8] sm:$0xff]
      %v863 = vld [vmem:[#allocation2 + $0x1b0] sm:$0xff]
      %v864 = vld [vmem:[#allocation2 + $0x1b8] sm:$0xff]
      %v865 = vld [vmem:[#allocation2 + $0x1c0] sm:$0xff]
      %v866 = vld [vmem:[#allocation2 + $0x1c8] sm:$0xff]
      %v867 = vld [vmem:[#allocation2 + $0x1d0] sm:$0xff]
      %v868 = vld [vmem:[#allocation2 + $0x1d8] sm:$0xff]
      %v869 = vld [vmem:[#allocation2 + $0x1e0] sm:$0xff]
      %v870 = vld [vmem:[#allocation2 + $0x1e8] sm:$0xff]
      %v871 = vld [vmem:[#allocation2 + $0x1f0] sm:$0xff]
      %v872 = vld [vmem:[#allocation2 + $0x1f8] sm:$0xff]
      %v873 = vld [vmem:[#allocation2 + $0x200] sm:$0xff]
      %v874 = vld [vmem:[#allocation2 + $0x208] sm:$0xff]
      %v875 = vld [vmem:[#allocation2 + $0x210] sm:$0xff]
      %v876 = vld [vmem:[#allocation2 + $0x218] sm:$0xff]
      %v877 = vld [vmem:[#allocation2 + $0x220] sm:$0xff]
      %v878 = vld [vmem:[#allocation2 + $0x228] sm:$0xff]
      %v879 = vld [vmem:[#allocation2 + $0x230] sm:$0xff]
      %v880 = vld [vmem:[#allocation2 + $0x238] sm:$0xff]
      %v881 = vld [vmem:[%s4] sm:$0xff]
      %v882 = vld [vmem:[%s4 + $0x8] sm:$0xff]
      %v883 = vld [vmem:[%s4 + $0x10] sm:$0xff]
      %v884 = vld [vmem:[%s4 + $0x18] sm:$0xff]
      %886 = vset.pattern.permute.xlu0 0
      %887 = vperm.xlu0 %886, %v881
      %v888 = vpop.permute.xlu0 %887
      %891 = vset.pattern.permute.xlu0 0
      %892 = vperm.xlu0 %891, %v882
      %v893 = vpop.permute.xlu0 %892
      %896 = vset.pattern.permute.xlu0 0
      %897 = vperm.xlu0 %896, %v883
      %v898 = vpop.permute.xlu0 %897
      %901 = vset.pattern.permute.xlu0 0
      %902 = vperm.xlu0 %901, %v884
      %v903 = vpop.permute.xlu0 %902
      %vm905 = vcmask 261120
      %v907 = vsel %vm905, %v799, 0
      %v910 = vsel %vm905, %v802, 0
      %v913 = vsel %vm905, %v805, 0
      %v916 = vsel %vm905, %v808, 0
      %918 = vmatprep.subr.mxu0 %v810
      %919 = vmatpush1.msra.mxu0 %v809
      %920 = vmatprep.subr.mxu0 %v812
      %921 = vmatpush1.msra.mxu0 %v811
      %922 = vmatprep.subr.mxu0 %v814
      %923 = vmatpush1.msra.mxu0 %v813
      %924 = vmatprep.subr.mxu0 %v816
      %925 = vmatpush1.msra.mxu0 %v815
      %926 = vmatprep.subr.mxu0 %v818
      %927 = vmatpush1.msra.mxu0 %v817
      %928 = vmatprep.subr.mxu0 %v820
      %929 = vmatpush1.msra.mxu0 %v819
      %930 = vmatprep.subr.mxu0 %v822
      %931 = vmatpush1.msra.mxu0 %v821
      %932 = vmatprep.subr.mxu0 %v824
      %933 = vmatpush1.msra.mxu0 %v823
      %934 = vmatprep.subr.mxu0 %v826
      %935 = vmatpush1.msra.mxu0 %v825
      %936 = vmatprep.subr.mxu0 %v828
      %937 = vmatpush1.msra.mxu0 %v827
      %938 = vmatprep.subr.mxu0 %v830
      %939 = vmatpush1.msra.mxu0 %v829
      %940 = vmatprep.subr.mxu0 %v832
      %941 = vmatpush1.msra.mxu0 %v831
      %942 = vmatprep.subr.mxu0 %v834
      %943 = vmatpush1.msra.mxu0 %v833
      %944 = vmatprep.subr.mxu0 %v836
      %945 = vmatpush1.msra.mxu0 %v835
      %946 = vmatprep.subr.mxu0 %v838
      %947 = vmatpush1.msra.mxu0 %v837
      %948 = vmatprep.subr.mxu0 %v840
      %949 = vmatpush1.msra.mxu0 %v839
      %950 = vmatprep.subr.mxu0 %v842
      %951 = vmatpush1.msra.mxu0 %v841
      %952 = vmatprep.subr.mxu0 %v844
      %953 = vmatpush1.msra.mxu0 %v843
      %954 = vmatprep.subr.mxu0 %v846
      %955 = vmatpush1.msra.mxu0 %v845
      %956 = vmatprep.subr.mxu0 %v848
      %957 = vmatpush1.msra.mxu0 %v847
      %958 = vmatprep.subr.mxu0 %v850
      %959 = vmatpush1.msra.mxu0 %v849
      %960 = vmatprep.subr.mxu0 %v852
      %961 = vmatpush1.msra.mxu0 %v851
      %962 = vmatprep.subr.mxu0 %v854
      %963 = vmatpush1.msra.mxu0 %v853
      %964 = vmatprep.subr.mxu0 %v856
      %965 = vmatpush1.msra.mxu0 %v855
      %966 = vmatprep.subr.mxu0 %v858
      %967 = vmatpush1.msra.mxu0 %v857
      %968 = vmatprep.subr.mxu0 %v860
      %969 = vmatpush1.msra.mxu0 %v859
      %970 = vmatprep.subr.mxu0 %v862
      %971 = vmatpush1.msra.mxu0 %v861
      %972 = vmatprep.subr.mxu0 %v864
      %973 = vmatpush1.msra.mxu0 %v863
      %974 = vmatprep.subr.mxu0 %v866
      %975 = vmatpush1.msra.mxu0 %v865
      %976 = vmatprep.subr.mxu0 %v868
      %977 = vmatpush1.msra.mxu0 %v867
      %978 = vmatprep.subr.mxu0 %v870
      %979 = vmatpush1.msra.mxu0 %v869
      %980 = vmatprep.subr.mxu0 %v872
      %981 = vmatpush1.msra.mxu0 %v871
      %982 = vmatprep.mubr.f32.mxu0 %v798
      %983 = vmatmul.mubr.f32.gmra.mrb[0].mxu0 %v797
      %v984 = vpop.f32.mrb[0].mxu0
      %v985 = vadd.f32 %v888, %v984
      %v986 = vpop.f32.mrb[0].mxu0
      %v987 = vadd.f32 %v888, %v986
      %988 = vmatprep.mubr.f32.mxu0 %v801
      %989 = vmatmul.mubr.f32.gmra.mrb[0].mxu0 %v800
      %v990 = vpop.f32.mrb[0].mxu0
      %v991 = vadd.f32 %v893, %v990
      %v992 = vpop.f32.mrb[0].mxu0
      %v993 = vadd.f32 %v893, %v992
      %994 = vmatprep.mubr.f32.mxu0 %v804
      %995 = vmatmul.mubr.f32.gmra.mrb[0].mxu0 %v803
      %v996 = vpop.f32.mrb[0].mxu0
      %v997 = vadd.f32 %v898, %v996
      %v998 = vpop.f32.mrb[0].mxu0
      %v999 = vadd.f32 %v898, %v998
      %1000 = vmatprep.mubr.f32.mxu0 %v807
      %1001 = vmatmul.mubr.f32.gmra.mrb[0].mxu0 %v806
      %v1002 = vpop.f32.mrb[0].mxu0
      %v1003 = vadd.f32 %v903, %v1002
      %v1004 = vpop.f32.mrb[0].mxu0
      %v1005 = vadd.f32 %v903, %v1004
      %1006 = vdwg.mxu0
      %1007 = vmatprep.subr.mxu0 %v874
      %1008 = vmatpush1.msra.mxu0 %v873
      %1009 = vmatprep.subr.mxu0 %v876
      %1010 = vmatpush1.msra.mxu0 %v875
      %1011 = vmatprep.subr.mxu0 %v878
      %1012 = vmatpush1.msra.mxu0 %v877
      %1013 = vmatprep.subr.mxu0 %v880
      %1014 = vmatpush1.msra.mxu0 %v879
      %1015 = vmatprep.subr.mxu0 0.0
      %1016 = vmatpush1.msra.mxu0 0.0
      %1017 = vmatprep.subr.mxu0 0.0
      %1018 = vmatpush1.msra.mxu0 0.0
      %1019 = vmatprep.subr.mxu0 0.0
      %1020 = vmatpush1.msra.mxu0 0.0
      %1021 = vmatprep.subr.mxu0 0.0
      %1022 = vmatpush1.msra.mxu0 0.0
      %1023 = vmatprep.subr.mxu0 0.0
      %1024 = vmatpush1.msra.mxu0 0.0
      %1025 = vmatprep.subr.mxu0 0.0
      %1026 = vmatpush1.msra.mxu0 0.0
      %1027 = vmatprep.subr.mxu0 0.0
      %1028 = vmatpush1.msra.mxu0 0.0
      %1029 = vmatprep.subr.mxu0 0.0
      %1030 = vmatpush1.msra.mxu0 0.0
      %1031 = vmatprep.subr.mxu0 0.0
      %1032 = vmatpush1.msra.mxu0 0.0
      %1033 = vmatprep.subr.mxu0 0.0
      %1034 = vmatpush1.msra.mxu0 0.0
      %1035 = vmatprep.subr.mxu0 0.0
      %1036 = vmatpush1.msra.mxu0 0.0
      %1037 = vmatprep.subr.mxu0 0.0
      %1038 = vmatpush1.msra.mxu0 0.0
      %1039 = vmatprep.subr.mxu0 0.0
      %1040 = vmatpush1.msra.mxu0 0.0
      %1041 = vmatprep.subr.mxu0 0.0
      %1042 = vmatpush1.msra.mxu0 0.0
      %1043 = vmatprep.subr.mxu0 0.0
      %1044 = vmatpush1.msra.mxu0 0.0
      %1045 = vmatprep.subr.mxu0 0.0
      %1046 = vmatpush1.msra.mxu0 0.0
      %1047 = vmatprep.subr.mxu0 0.0
      %1048 = vmatpush1.msra.mxu0 0.0
      %1049 = vmatprep.subr.mxu0 0.0
      %1050 = vmatpush1.msra.mxu0 0.0
      %1051 = vmatprep.subr.mxu0 0.0
      %1052 = vmatpush1.msra.mxu0 0.0
      %1053 = vmatprep.subr.mxu0 0.0
      %1054 = vmatpush1.msra.mxu0 0.0
      %1055 = vmatprep.subr.mxu0 0.0
      %1056 = vmatpush1.msra.mxu0 0.0
      %1057 = vmatprep.subr.mxu0 0.0
      %1058 = vmatpush1.msra.mxu0 0.0
      %1059 = vmatprep.subr.mxu0 0.0
      %1060 = vmatpush1.msra.mxu0 0.0
      %1061 = vmatprep.subr.mxu0 0.0
      %1062 = vmatpush1.msra.mxu0 0.0
      %1063 = vmatprep.subr.mxu0 0.0
      %1064 = vmatpush1.msra.mxu0 0.0
      %1065 = vmatprep.subr.mxu0 0.0
      %1066 = vmatpush1.msra.mxu0 0.0
      %1067 = vmatprep.subr.mxu0 0.0
      %1068 = vmatpush1.msra.mxu0 0.0
      %1069 = vmatprep.subr.mxu0 0.0
      %1070 = vmatpush1.msra.mxu0 0.0
      %1071 = vmatprep.mubr.f32.mxu0 0.0
      %1072 = vmatmul.mubr.f32.gmra.mrb[0].mxu0 %v907
      %v1073 = vpop.f32.mrb[0].mxu0
      %v1074 = vadd.f32 %v985, %v1073
      %v1075 = vpop.f32.mrb[0].mxu0
      %v1076 = vadd.f32 %v987, %v1075
      %1077 = vmatprep.mubr.f32.mxu0 0.0
      %1078 = vmatmul.mubr.f32.gmra.mrb[0].mxu0 %v910
      %v1079 = vpop.f32.mrb[0].mxu0
      %v1080 = vadd.f32 %v991, %v1079
      %v1081 = vpop.f32.mrb[0].mxu0
      %v1082 = vadd.f32 %v993, %v1081
      %1083 = vmatprep.mubr.f32.mxu0 0.0
      %1084 = vmatmul.mubr.f32.gmra.mrb[0].mxu0 %v913
      %v1085 = vpop.f32.mrb[0].mxu0
      %v1086 = vadd.f32 %v997, %v1085
      %v1087 = vpop.f32.mrb[0].mxu0
      %v1088 = vadd.f32 %v999, %v1087
      %1089 = vmatprep.mubr.f32.mxu0 0.0
      %1090 = vmatmul.mubr.f32.gmra.mrb[0].mxu0 %v916
      %v1091 = vpop.f32.mrb[0].mxu0
      %v1092 = vadd.f32 %v1003, %v1091
      %v1093 = vpop.f32.mrb[0].mxu0
      %v1094 = vadd.f32 %v1005, %v1093
      %1095 = vdwg.mxu0
      %v1096 = vmax.f32 %v1074, 0.0
      %v1097 = vmax.f32 %v1076, 0.0
      %v1098 = vmax.f32 %v1080, 0.0
      %v1099 = vmax.f32 %v1082, 0.0
      %v1100 = vmax.f32 %v1086, 0.0
      %v1101 = vmax.f32 %v1088, 0.0
      %v1102 = vmax.f32 %v1092, 0.0
      %v1103 = vmax.f32 %v1094, 0.0
      %v1104 = vld [vmem:[%s5] sm:$0xff]
      %v1105 = vld [vmem:[%s5 + $0x8] sm:$0xff]
      %v1106 = vld [vmem:[%s5 + $0x10] sm:$0xff]
      %v1107 = vld [vmem:[%s5 + $0x18] sm:$0xff]
      %1109 = vset.pattern.permute.xlu0 0
      %1110 = vperm.xlu0 %1109, %v1104
      %v1111 = vpop.permute.xlu0 %1110
      %1114 = vset.pattern.permute.xlu0 0
      %1115 = vperm.xlu0 %1114, %v1105
      %v1116 = vpop.permute.xlu0 %1115
      %1119 = vset.pattern.permute.xlu0 0
      %1120 = vperm.xlu0 %1119, %v1106
      %v1121 = vpop.permute.xlu0 %1120
      %1124 = vset.pattern.permute.xlu0 0
      %1125 = vperm.xlu0 %1124, %v1107
      %v1126 = vpop.permute.xlu0 %1125
      %v1128 = vmul.f32 %v1096, %v1111
      %v1129 = vmul.f32 %v1097, %v1111
      %v1130 = vmul.f32 %v1098, %v1116
      %v1131 = vmul.f32 %v1099, %v1116
      %v1132 = vmul.f32 %v1100, %v1121
      %v1133 = vmul.f32 %v1101, %v1121
      %v1134 = vmul.f32 %v1102, %v1126
      %v1135 = vmul.f32 %v1103, %v1126
      %v1136 = vadd.f32 %v1128, 0.0
      %v1137 = vadd.f32 %v1129, 0.0
      %v1138 = vadd.f32 %v1130, 0.0
      %v1139 = vadd.f32 %v1131, 0.0
      %v1140 = vadd.f32 %v1132, 0.0
      %v1141 = vadd.f32 %v1133, 0.0
      %v1142 = vadd.f32 %v1134, 0.0
      %v1143 = vadd.f32 %v1135, 0.0
      %1144 = vrot.lane.b32.xlu0 %v1096, 127
      %v1145 = vpop.permute.xlu0 %1144
      %1146 = vrot.lane.b32.xlu0 %v1098, 127
      %v1147 = vpop.permute.xlu0 %1146
      %1148 = vrot.lane.b32.xlu0 %v1100, 127
      %v1149 = vpop.permute.xlu0 %1148
      %1150 = vrot.lane.b32.xlu0 %v1102, 127
      %v1151 = vpop.permute.xlu0 %1150
      %1152 = vrot.lane.b32.xlu0 %v1097, 127
      %v1153 = vpop.permute.xlu0 %1152
      %1154 = vrot.lane.b32.xlu0 %v1099, 127
      %v1155 = vpop.permute.xlu0 %1154
      %1156 = vrot.lane.b32.xlu0 %v1101, 127
      %v1157 = vpop.permute.xlu0 %1156
      %1158 = vrot.lane.b32.xlu0 %v1103, 127
      %v1159 = vpop.permute.xlu0 %1158
      %v1160 = vsel %vm309, %v1145, %v1153
      %v1161 = vsel %vm309, %v1147, %v1155
      %v1162 = vsel %vm309, %v1149, %v1157
      %v1163 = vsel %vm309, %v1151, %v1159
      %v1164 = vsel %vm309, %v1153, %v1145
      %v1165 = vsel %vm309, %v1155, %v1147
      %v1166 = vsel %vm309, %v1157, %v1149
      %v1167 = vsel %vm309, %v1159, %v1151
      %s1168 = scalar_lea.vmem %s5, 32
      %v1169 = vld [vmem:[%s1168] sm:$0xff]
      %v1170 = vld [vmem:[%s1168 + $0x8] sm:$0xff]
      %v1171 = vld [vmem:[%s1168 + $0x10] sm:$0xff]
      %v1172 = vld [vmem:[%s1168 + $0x18] sm:$0xff]
      %1174 = vset.pattern.permute.xlu0 0
      %1175 = vperm.xlu0 %1174, %v1169
      %v1176 = vpop.permute.xlu0 %1175
      %1179 = vset.pattern.permute.xlu0 0
      %1180 = vperm.xlu0 %1179, %v1170
      %v1181 = vpop.permute.xlu0 %1180
      %1184 = vset.pattern.permute.xlu0 0
      %1185 = vperm.xlu0 %1184, %v1171
      %v1186 = vpop.permute.xlu0 %1185
      %1189 = vset.pattern.permute.xlu0 0
      %1190 = vperm.xlu0 %1189, %v1172
      %v1191 = vpop.permute.xlu0 %1190
      %v1193 = vmul.f32 %v1160, %v1176
      %v1194 = vmul.f32 %v1164, %v1176
      %v1195 = vmul.f32 %v1161, %v1181
      %v1196 = vmul.f32 %v1165, %v1181
      %v1197 = vmul.f32 %v1162, %v1186
      %v1198 = vmul.f32 %v1166, %v1186
      %v1199 = vmul.f32 %v1163, %v1191
      %v1200 = vmul.f32 %v1167, %v1191
      %v1201 = vadd.f32 %v1136, %v1193
      %v1202 = vadd.f32 %v1137, %v1194
      %v1203 = vadd.f32 %v1138, %v1195
      %v1204 = vadd.f32 %v1139, %v1196
      %v1205 = vadd.f32 %v1140, %v1197
      %v1206 = vadd.f32 %v1141, %v1198
      %v1207 = vadd.f32 %v1142, %v1199
      %v1208 = vadd.f32 %v1143, %v1200
      %1209 = vrot.lane.b32.xlu0 %v1096, 126
      %v1210 = vpop.permute.xlu0 %1209
      %1211 = vrot.lane.b32.xlu0 %v1098, 126
      %v1212 = vpop.permute.xlu0 %1211
      %1213 = vrot.lane.b32.xlu0 %v1100, 126
      %v1214 = vpop.permute.xlu0 %1213
      %1215 = vrot.lane.b32.xlu0 %v1102, 126
      %v1216 = vpop.permute.xlu0 %1215
      %1217 = vrot.lane.b32.xlu0 %v1097, 126
      %v1218 = vpop.permute.xlu0 %1217
      %1219 = vrot.lane.b32.xlu0 %v1099, 126
      %v1220 = vpop.permute.xlu0 %1219
      %1221 = vrot.lane.b32.xlu0 %v1101, 126
      %v1222 = vpop.permute.xlu0 %1221
      %1223 = vrot.lane.b32.xlu0 %v1103, 126
      %v1224 = vpop.permute.xlu0 %1223
      %v1225 = vsel %vm318, %v1210, %v1218
      %v1226 = vsel %vm318, %v1212, %v1220
      %v1227 = vsel %vm318, %v1214, %v1222
      %v1228 = vsel %vm318, %v1216, %v1224
      %v1229 = vsel %vm318, %v1218, %v1210
      %v1230 = vsel %vm318, %v1220, %v1212
      %v1231 = vsel %vm318, %v1222, %v1214
      %v1232 = vsel %vm318, %v1224, %v1216
      %s1233 = scalar_lea.vmem %s5, 64
      %v1234 = vld [vmem:[%s1233] sm:$0xff]
      %v1235 = vld [vmem:[%s1233 + $0x8] sm:$0xff]
      %v1236 = vld [vmem:[%s1233 + $0x10] sm:$0xff]
      %v1237 = vld [vmem:[%s1233 + $0x18] sm:$0xff]
      %1239 = vset.pattern.permute.xlu0 0
      %1240 = vperm.xlu0 %1239, %v1234
      %v1241 = vpop.permute.xlu0 %1240
      %1244 = vset.pattern.permute.xlu0 0
      %1245 = vperm.xlu0 %1244, %v1235
      %v1246 = vpop.permute.xlu0 %1245
      %1249 = vset.pattern.permute.xlu0 0
      %1250 = vperm.xlu0 %1249, %v1236
      %v1251 = vpop.permute.xlu0 %1250
      %1254 = vset.pattern.permute.xlu0 0
      %1255 = vperm.xlu0 %1254, %v1237
      %v1256 = vpop.permute.xlu0 %1255
      %v1258 = vmul.f32 %v1225, %v1241
      %v1259 = vmul.f32 %v1229, %v1241
      %v1260 = vmul.f32 %v1226, %v1246
      %v1261 = vmul.f32 %v1230, %v1246
      %v1262 = vmul.f32 %v1227, %v1251
      %v1263 = vmul.f32 %v1231, %v1251
      %v1264 = vmul.f32 %v1228, %v1256
      %v1265 = vmul.f32 %v1232, %v1256
      %v1266 = vadd.f32 %v1201, %v1258
      %v1267 = vadd.f32 %v1202, %v1259
      %v1268 = vadd.f32 %v1203, %v1260
      %v1269 = vadd.f32 %v1204, %v1261
      %v1270 = vadd.f32 %v1205, %v1262
      %v1271 = vadd.f32 %v1206, %v1263
      %v1272 = vadd.f32 %v1207, %v1264
      %v1273 = vadd.f32 %v1208, %v1265
      %1274 = vrot.lane.b32.xlu0 %v1096, 112
      %v1275 = vpop.permute.xlu0 %1274
      %1276 = vrot.lane.b32.xlu0 %v1098, 112
      %v1277 = vpop.permute.xlu0 %1276
      %1278 = vrot.lane.b32.xlu0 %v1100, 112
      %v1279 = vpop.permute.xlu0 %1278
      %1280 = vrot.lane.b32.xlu0 %v1102, 112
      %v1281 = vpop.permute.xlu0 %1280
      %1282 = vrot.lane.b32.xlu0 %v1097, 112
      %v1283 = vpop.permute.xlu0 %1282
      %1284 = vrot.lane.b32.xlu0 %v1099, 112
      %v1285 = vpop.permute.xlu0 %1284
      %1286 = vrot.lane.b32.xlu0 %v1101, 112
      %v1287 = vpop.permute.xlu0 %1286
      %1288 = vrot.lane.b32.xlu0 %v1103, 112
      %v1289 = vpop.permute.xlu0 %1288
      %v1290 = vsel %vm327, %v1275, %v1283
      %v1291 = vsel %vm327, %v1277, %v1285
      %v1292 = vsel %vm327, %v1279, %v1287
      %v1293 = vsel %vm327, %v1281, %v1289
      %v1294 = vsel %vm327, %v1283, %v1275
      %v1295 = vsel %vm327, %v1285, %v1277
      %v1296 = vsel %vm327, %v1287, %v1279
      %v1297 = vsel %vm327, %v1289, %v1281
      %s1298 = scalar_lea.vmem %s5, 96
      %v1299 = vld [vmem:[%s1298] sm:$0xff]
      %v1300 = vld [vmem:[%s1298 + $0x8] sm:$0xff]
      %v1301 = vld [vmem:[%s1298 + $0x10] sm:$0xff]
      %v1302 = vld [vmem:[%s1298 + $0x18] sm:$0xff]
      %1304 = vset.pattern.permute.xlu0 0
      %1305 = vperm.xlu0 %1304, %v1299
      %v1306 = vpop.permute.xlu0 %1305
      %1309 = vset.pattern.permute.xlu0 0
      %1310 = vperm.xlu0 %1309, %v1300
      %v1311 = vpop.permute.xlu0 %1310
      %1314 = vset.pattern.permute.xlu0 0
      %1315 = vperm.xlu0 %1314, %v1301
      %v1316 = vpop.permute.xlu0 %1315
      %1319 = vset.pattern.permute.xlu0 0
      %1320 = vperm.xlu0 %1319, %v1302
      %v1321 = vpop.permute.xlu0 %1320
      %v1323 = vmul.f32 %v1290, %v1306
      %v1324 = vmul.f32 %v1294, %v1306
      %v1325 = vmul.f32 %v1291, %v1311
      %v1326 = vmul.f32 %v1295, %v1311
      %v1327 = vmul.f32 %v1292, %v1316
      %v1328 = vmul.f32 %v1296, %v1316
      %v1329 = vmul.f32 %v1293, %v1321
      %v1330 = vmul.f32 %v1297, %v1321
      %v1331 = vadd.f32 %v1266, %v1323
      %v1332 = vadd.f32 %v1267, %v1324
      %v1333 = vadd.f32 %v1268, %v1325
      %v1334 = vadd.f32 %v1269, %v1326
      %v1335 = vadd.f32 %v1270, %v1327
      %v1336 = vadd.f32 %v1271, %v1328
      %v1337 = vadd.f32 %v1272, %v1329
      %v1338 = vadd.f32 %v1273, %v1330
      %1339 = vrot.lane.b32.xlu0 %v1096, 111
      %v1340 = vpop.permute.xlu0 %1339
      %1341 = vrot.lane.b32.xlu0 %v1098, 111
      %v1342 = vpop.permute.xlu0 %1341
      %1343 = vrot.lane.b32.xlu0 %v1100, 111
      %v1344 = vpop.permute.xlu0 %1343
      %1345 = vrot.lane.b32.xlu0 %v1102, 111
      %v1346 = vpop.permute.xlu0 %1345
      %1347 = vrot.lane.b32.xlu0 %v1097, 111
      %v1348 = vpop.permute.xlu0 %1347
      %1349 = vrot.lane.b32.xlu0 %v1099, 111
      %v1350 = vpop.permute.xlu0 %1349
      %1351 = vrot.lane.b32.xlu0 %v1101, 111
      %v1352 = vpop.permute.xlu0 %1351
      %1353 = vrot.lane.b32.xlu0 %v1103, 111
      %v1354 = vpop.permute.xlu0 %1353
      %v1355 = vsel %vm336, %v1340, %v1348
      %v1356 = vsel %vm336, %v1342, %v1350
      %v1357 = vsel %vm336, %v1344, %v1352
      %v1358 = vsel %vm336, %v1346, %v1354
      %v1359 = vsel %vm336, %v1348, %v1340
      %v1360 = vsel %vm336, %v1350, %v1342
      %v1361 = vsel %vm336, %v1352, %v1344
      %v1362 = vsel %vm336, %v1354, %v1346
      %s1363 = scalar_lea.vmem %s5, 128
      %v1364 = vld [vmem:[%s1363] sm:$0xff]
      %v1365 = vld [vmem:[%s1363 + $0x8] sm:$0xff]
      %v1366 = vld [vmem:[%s1363 + $0x10] sm:$0xff]
      %v1367 = vld [vmem:[%s1363 + $0x18] sm:$0xff]
      %1369 = vset.pattern.permute.xlu0 0
      %1370 = vperm.xlu0 %1369, %v1364
      %v1371 = vpop.permute.xlu0 %1370
      %1374 = vset.pattern.permute.xlu0 0
      %1375 = vperm.xlu0 %1374, %v1365
      %v1376 = vpop.permute.xlu0 %1375
      %1379 = vset.pattern.permute.xlu0 0
      %1380 = vperm.xlu0 %1379, %v1366
      %v1381 = vpop.permute.xlu0 %1380
      %1384 = vset.pattern.permute.xlu0 0
      %1385 = vperm.xlu0 %1384, %v1367
      %v1386 = vpop.permute.xlu0 %1385
      %v1388 = vmul.f32 %v1355, %v1371
      %v1389 = vmul.f32 %v1359, %v1371
      %v1390 = vmul.f32 %v1356, %v1376
      %v1391 = vmul.f32 %v1360, %v1376
      %v1392 = vmul.f32 %v1357, %v1381
      %v1393 = vmul.f32 %v1361, %v1381
      %v1394 = vmul.f32 %v1358, %v1386
      %v1395 = vmul.f32 %v1362, %v1386
      %v1396 = vadd.f32 %v1331, %v1388
      %v1397 = vadd.f32 %v1332, %v1389
      %v1398 = vadd.f32 %v1333, %v1390
      %v1399 = vadd.f32 %v1334, %v1391
      %v1400 = vadd.f32 %v1335, %v1392
      %v1401 = vadd.f32 %v1336, %v1393
      %v1402 = vadd.f32 %v1337, %v1394
      %v1403 = vadd.f32 %v1338, %v1395
      %1404 = vrot.lane.b32.xlu0 %v1096, 110
      %v1405 = vpop.permute.xlu0 %1404
      %1406 = vrot.lane.b32.xlu0 %v1098, 110
      %v1407 = vpop.permute.xlu0 %1406
      %1408 = vrot.lane.b32.xlu0 %v1100, 110
      %v1409 = vpop.permute.xlu0 %1408
      %1410 = vrot.lane.b32.xlu0 %v1102, 110
      %v1411 = vpop.permute.xlu0 %1410
      %1412 = vrot.lane.b32.xlu0 %v1097, 110
      %v1413 = vpop.permute.xlu0 %1412
      %1414 = vrot.lane.b32.xlu0 %v1099, 110
      %v1415 = vpop.permute.xlu0 %1414
      %1416 = vrot.lane.b32.xlu0 %v1101, 110
      %v1417 = vpop.permute.xlu0 %1416
      %1418 = vrot.lane.b32.xlu0 %v1103, 110
      %v1419 = vpop.permute.xlu0 %1418
      %v1420 = vsel %vm345, %v1405, %v1413
      %v1421 = vsel %vm345, %v1407, %v1415
      %v1422 = vsel %vm345, %v1409, %v1417
      %v1423 = vsel %vm345, %v1411, %v1419
      %v1424 = vsel %vm345, %v1413, %v1405
      %v1425 = vsel %vm345, %v1415, %v1407
      %v1426 = vsel %vm345, %v1417, %v1409
      %v1427 = vsel %vm345, %v1419, %v1411
      %s1428 = scalar_lea.vmem %s5, 160
      %v1429 = vld [vmem:[%s1428] sm:$0xff]
      %v1430 = vld [vmem:[%s1428 + $0x8] sm:$0xff]
      %v1431 = vld [vmem:[%s1428 + $0x10] sm:$0xff]
      %v1432 = vld [vmem:[%s1428 + $0x18] sm:$0xff]
      %1434 = vset.pattern.permute.xlu0 0
      %1435 = vperm.xlu0 %1434, %v1429
      %v1436 = vpop.permute.xlu0 %1435
      %1439 = vset.pattern.permute.xlu0 0
      %1440 = vperm.xlu0 %1439, %v1430
      %v1441 = vpop.permute.xlu0 %1440
      %1444 = vset.pattern.permute.xlu0 0
      %1445 = vperm.xlu0 %1444, %v1431
      %v1446 = vpop.permute.xlu0 %1445
      %1449 = vset.pattern.permute.xlu0 0
      %1450 = vperm.xlu0 %1449, %v1432
      %v1451 = vpop.permute.xlu0 %1450
      %v1453 = vmul.f32 %v1420, %v1436
      %v1454 = vmul.f32 %v1424, %v1436
      %v1455 = vmul.f32 %v1421, %v1441
      %v1456 = vmul.f32 %v1425, %v1441
      %v1457 = vmul.f32 %v1422, %v1446
      %v1458 = vmul.f32 %v1426, %v1446
      %v1459 = vmul.f32 %v1423, %v1451
      %v1460 = vmul.f32 %v1427, %v1451
      %v1461 = vadd.f32 %v1396, %v1453
      %v1462 = vadd.f32 %v1397, %v1454
      %v1463 = vadd.f32 %v1398, %v1455
      %v1464 = vadd.f32 %v1399, %v1456
      %v1465 = vadd.f32 %v1400, %v1457
      %v1466 = vadd.f32 %v1401, %v1458
      %v1467 = vadd.f32 %v1402, %v1459
      %v1468 = vadd.f32 %v1403, %v1460
      %1469 = vrot.lane.b32.xlu0 %v1096, 96
      %v1470 = vpop.permute.xlu0 %1469
      %1471 = vrot.lane.b32.xlu0 %v1098, 96
      %v1472 = vpop.permute.xlu0 %1471
      %1473 = vrot.lane.b32.xlu0 %v1100, 96
      %v1474 = vpop.permute.xlu0 %1473
      %1475 = vrot.lane.b32.xlu0 %v1102, 96
      %v1476 = vpop.permute.xlu0 %1475
      %1477 = vrot.lane.b32.xlu0 %v1097, 96
      %v1478 = vpop.permute.xlu0 %1477
      %1479 = vrot.lane.b32.xlu0 %v1099, 96
      %v1480 = vpop.permute.xlu0 %1479
      %1481 = vrot.lane.b32.xlu0 %v1101, 96
      %v1482 = vpop.permute.xlu0 %1481
      %1483 = vrot.lane.b32.xlu0 %v1103, 96
      %v1484 = vpop.permute.xlu0 %1483
      %v1485 = vsel %vm354, %v1470, %v1478
      %v1486 = vsel %vm354, %v1472, %v1480
      %v1487 = vsel %vm354, %v1474, %v1482
      %v1488 = vsel %vm354, %v1476, %v1484
      %v1489 = vsel %vm354, %v1478, %v1470
      %v1490 = vsel %vm354, %v1480, %v1472
      %v1491 = vsel %vm354, %v1482, %v1474
      %v1492 = vsel %vm354, %v1484, %v1476
      %s1493 = scalar_lea.vmem %s5, 192
      %v1494 = vld [vmem:[%s1493] sm:$0xff]
      %v1495 = vld [vmem:[%s1493 + $0x8] sm:$0xff]
      %v1496 = vld [vmem:[%s1493 + $0x10] sm:$0xff]
      %v1497 = vld [vmem:[%s1493 + $0x18] sm:$0xff]
      %1499 = vset.pattern.permute.xlu0 0
      %1500 = vperm.xlu0 %1499, %v1494
      %v1501 = vpop.permute.xlu0 %1500
      %1504 = vset.pattern.permute.xlu0 0
      %1505 = vperm.xlu0 %1504, %v1495
      %v1506 = vpop.permute.xlu0 %1505
      %1509 = vset.pattern.permute.xlu0 0
      %1510 = vperm.xlu0 %1509, %v1496
      %v1511 = vpop.permute.xlu0 %1510
      %1514 = vset.pattern.permute.xlu0 0
      %1515 = vperm.xlu0 %1514, %v1497
      %v1516 = vpop.permute.xlu0 %1515
      %v1518 = vmul.f32 %v1485, %v1501
      %v1519 = vmul.f32 %v1489, %v1501
      %v1520 = vmul.f32 %v1486, %v1506
      %v1521 = vmul.f32 %v1490, %v1506
      %v1522 = vmul.f32 %v1487, %v1511
      %v1523 = vmul.f32 %v1491, %v1511
      %v1524 = vmul.f32 %v1488, %v1516
      %v1525 = vmul.f32 %v1492, %v1516
      %v1526 = vadd.f32 %v1461, %v1518
      %v1527 = vadd.f32 %v1462, %v1519
      %v1528 = vadd.f32 %v1463, %v1520
      %v1529 = vadd.f32 %v1464, %v1521
      %v1530 = vadd.f32 %v1465, %v1522
      %v1531 = vadd.f32 %v1466, %v1523
      %v1532 = vadd.f32 %v1467, %v1524
      %v1533 = vadd.f32 %v1468, %v1525
      %1534 = vrot.lane.b32.xlu0 %v1096, 95
      %v1535 = vpop.permute.xlu0 %1534
      %1536 = vrot.lane.b32.xlu0 %v1098, 95
      %v1537 = vpop.permute.xlu0 %1536
      %1538 = vrot.lane.b32.xlu0 %v1100, 95
      %v1539 = vpop.permute.xlu0 %1538
      %1540 = vrot.lane.b32.xlu0 %v1102, 95
      %v1541 = vpop.permute.xlu0 %1540
      %1542 = vrot.lane.b32.xlu0 %v1097, 95
      %v1543 = vpop.permute.xlu0 %1542
      %1544 = vrot.lane.b32.xlu0 %v1099, 95
      %v1545 = vpop.permute.xlu0 %1544
      %1546 = vrot.lane.b32.xlu0 %v1101, 95
      %v1547 = vpop.permute.xlu0 %1546
      %1548 = vrot.lane.b32.xlu0 %v1103, 95
      %v1549 = vpop.permute.xlu0 %1548
      %v1550 = vsel %vm363, %v1535, %v1543
      %v1551 = vsel %vm363, %v1537, %v1545
      %v1552 = vsel %vm363, %v1539, %v1547
      %v1553 = vsel %vm363, %v1541, %v1549
      %v1554 = vsel %vm363, %v1543, %v1535
      %v1555 = vsel %vm363, %v1545, %v1537
      %v1556 = vsel %vm363, %v1547, %v1539
      %v1557 = vsel %vm363, %v1549, %v1541
      %s1558 = scalar_lea.vmem %s5, 224
      %v1559 = vld [vmem:[%s1558] sm:$0xff]
      %v1560 = vld [vmem:[%s1558 + $0x8] sm:$0xff]
      %v1561 = vld [vmem:[%s1558 + $0x10] sm:$0xff]
      %v1562 = vld [vmem:[%s1558 + $0x18] sm:$0xff]
      %1564 = vset.pattern.permute.xlu0 0
      %1565 = vperm.xlu0 %1564, %v1559
      %v1566 = vpop.permute.xlu0 %1565
      %1569 = vset.pattern.permute.xlu0 0
      %1570 = vperm.xlu0 %1569, %v1560
      %v1571 = vpop.permute.xlu0 %1570
      %1574 = vset.pattern.permute.xlu0 0
      %1575 = vperm.xlu0 %1574, %v1561
      %v1576 = vpop.permute.xlu0 %1575
      %1579 = vset.pattern.permute.xlu0 0
      %1580 = vperm.xlu0 %1579, %v1562
      %v1581 = vpop.permute.xlu0 %1580
      %v1583 = vmul.f32 %v1550, %v1566
      %v1584 = vmul.f32 %v1554, %v1566
      %v1585 = vmul.f32 %v1551, %v1571
      %v1586 = vmul.f32 %v1555, %v1571
      %v1587 = vmul.f32 %v1552, %v1576
      %v1588 = vmul.f32 %v1556, %v1576
      %v1589 = vmul.f32 %v1553, %v1581
      %v1590 = vmul.f32 %v1557, %v1581
      %v1591 = vadd.f32 %v1526, %v1583
      %v1592 = vadd.f32 %v1527, %v1584
      %v1593 = vadd.f32 %v1528, %v1585
      %v1594 = vadd.f32 %v1529, %v1586
      %v1595 = vadd.f32 %v1530, %v1587
      %v1596 = vadd.f32 %v1531, %v1588
      %v1597 = vadd.f32 %v1532, %v1589
      %v1598 = vadd.f32 %v1533, %v1590
      %1599 = vrot.lane.b32.xlu0 %v1096, 94
      %v1600 = vpop.permute.xlu0 %1599
      %1601 = vrot.lane.b32.xlu0 %v1098, 94
      %v1602 = vpop.permute.xlu0 %1601
      %1603 = vrot.lane.b32.xlu0 %v1100, 94
      %v1604 = vpop.permute.xlu0 %1603
      %1605 = vrot.lane.b32.xlu0 %v1102, 94
      %v1606 = vpop.permute.xlu0 %1605
      %1607 = vrot.lane.b32.xlu0 %v1097, 94
      %v1608 = vpop.permute.xlu0 %1607
      %1609 = vrot.lane.b32.xlu0 %v1099, 94
      %v1610 = vpop.permute.xlu0 %1609
      %1611 = vrot.lane.b32.xlu0 %v1101, 94
      %v1612 = vpop.permute.xlu0 %1611
      %1613 = vrot.lane.b32.xlu0 %v1103, 94
      %v1614 = vpop.permute.xlu0 %1613
      %v1615 = vsel %vm372, %v1600, %v1608
      %v1616 = vsel %vm372, %v1602, %v1610
      %v1617 = vsel %vm372, %v1604, %v1612
      %v1618 = vsel %vm372, %v1606, %v1614
      %v1619 = vsel %vm372, %v1608, %v1600
      %v1620 = vsel %vm372, %v1610, %v1602
      %v1621 = vsel %vm372, %v1612, %v1604
      %v1622 = vsel %vm372, %v1614, %v1606
      %s1623 = scalar_lea.vmem %s5, 256
      %v1624 = vld [vmem:[%s1623] sm:$0xff]
      %v1625 = vld [vmem:[%s1623 + $0x8] sm:$0xff]
      %v1626 = vld [vmem:[%s1623 + $0x10] sm:$0xff]
      %v1627 = vld [vmem:[%s1623 + $0x18] sm:$0xff]
      %1629 = vset.pattern.permute.xlu0 0
      %1630 = vperm.xlu0 %1629, %v1624
      %v1631 = vpop.permute.xlu0 %1630
      %1634 = vset.pattern.permute.xlu0 0
      %1635 = vperm.xlu0 %1634, %v1625
      %v1636 = vpop.permute.xlu0 %1635
      %1639 = vset.pattern.permute.xlu0 0
      %1640 = vperm.xlu0 %1639, %v1626
      %v1641 = vpop.permute.xlu0 %1640
      %1644 = vset.pattern.permute.xlu0 0
      %1645 = vperm.xlu0 %1644, %v1627
      %v1646 = vpop.permute.xlu0 %1645
      %v1648 = vmul.f32 %v1615, %v1631
      %v1649 = vmul.f32 %v1619, %v1631
      %v1650 = vmul.f32 %v1616, %v1636
      %v1651 = vmul.f32 %v1620, %v1636
      %v1652 = vmul.f32 %v1617, %v1641
      %v1653 = vmul.f32 %v1621, %v1641
      %v1654 = vmul.f32 %v1618, %v1646
      %v1655 = vmul.f32 %v1622, %v1646
      %v1656 = vadd.f32 %v1591, %v1648
      %v1657 = vadd.f32 %v1592, %v1649
      %v1658 = vadd.f32 %v1593, %v1650
      %v1659 = vadd.f32 %v1594, %v1651
      %v1660 = vadd.f32 %v1595, %v1652
      %v1661 = vadd.f32 %v1596, %v1653
      %v1662 = vadd.f32 %v1597, %v1654
      %v1663 = vadd.f32 %v1598, %v1655
      %v1664 = vadd.f32 %v1656, %v1658
      %v1665 = vadd.f32 %v1664, %v1660
      %v1666 = vadd.f32 %v1665, %v1662
      %v1667 = vrot.slane %v1666, 4
      %v1668 = vadd.f32 %v1666, %v1667
      %v1669 = vrot.slane %v1668, 2
      %v1670 = vadd.f32 %v1668, %v1669
      %v1671 = vrot.slane %v1670, 1
      %v1672 = vadd.f32 %v1670, %v1671
      %v1673 = vadd.f32 %v1657, %v1659
      %v1674 = vadd.f32 %v1673, %v1661
      %v1675 = vadd.f32 %v1674, %v1663
      %v1676 = vrot.slane %v1675, 4
      %v1677 = vadd.f32 %v1675, %v1676
      %v1678 = vrot.slane %v1677, 2
      %v1679 = vadd.f32 %v1677, %v1678
      %v1680 = vrot.slane %v1679, 1
      %v1681 = vadd.f32 %v1679, %v1680
      %v1682 = vld [vmem:[#allocation3] sm:$0x1]
      %1684 = vset.pattern.permute.xlu0 0
      %1685 = vperm.xlu0 %1684, %v1682
      %v1686 = vpop.permute.xlu0 %1685
      %v1688 = vlaneseq
      %v1689 = vshrl.u32 %v1688, 7
      %v1690 = vsub.s32 0, %v1689
      %v1691 = vrot.slane %v1686, %v1690
      %v1692 = vadd.f32 %v1672, %v1691
      %v1693 = vadd.f32 %v1681, %v1691
      %v1696 = vcombine.low %v1692, %v1693
      %v1698 = vunpack.c.l.s4 1966171168
      %v1699 = vunpack.c.0.s8 %v1698
      %v1700 = vlaneseq
      %v1701 = vshrl.u32 %v1700, 7
      %v1702 = vsub.s32 %v1699, %v1701
      %v1703 = vrot.slane %v1696, %v1702
      %v1705 = vunpack.c.l.s4 1966171168
      %v1706 = vunpack.c.0.s8 %v1705
      %v1707 = vlaneseq
      %v1708 = vshrl.u32 %v1707, 7
      %v1709 = vsub.s32 %v1706, %v1708
      %v1710 = vrot.slane %v1703, %v1709
      %v1712 = vlaneseq
      %vm1713 = vcmp.ge.s32.totalorder %v1712, 0
      %vm1714 = vcmp.lt.s32.totalorder %v1712, 256
      %vm1715 = vmand %vm1713, %vm1714
      %1716 = vst.msk [vmem:[%s298] sm:$0x3] %vm1715, %v1710
      %p1717 = scmp.lt.s32.totalorder %s20, 1
      %s1718 = scalar_select %p1717, %s20, 1
      %s1719 = smul.addr %s1718, 2
      %s1720 = scalar_lea.vmem %s7, %s1719
      // Predicated region
      $region49: #{local_statistics_network_forward.1} parent=47 // pred_check
        %p1721 = pneg %p195
      $region50: #{local_statistics_network_forward.1} parent=47 // pred_check_branch
        %1723 = sbr.rel (%p1721) target = $region52
      $region51: #{local_statistics_network_forward.1} parent=47 // pred_region
        _
      $region52: #{local_statistics_network_forward.1} parent=47 // pred_fallthru
        _
    $region48: #{local_statistics_network_forward.1} parent=5 // pred_fallthru
      _
    %p1724 = scmp.le.s32.totalorder 2, %s15
    // Predicated region
    $region53: #{local_statistics_network_forward.1} parent=5 // pred_check
      %p1725 = pneg %p1724
    $region54: #{local_statistics_network_forward.1} parent=5 // pred_check_branch
      %1727 = sbr.rel (%p1725) target = $region56
    $region55: #{local_statistics_network_forward.1} parent=5 // pred_region
      %s1728 = ssub.s32 %s15, 2
      // Predicated region
      $region57: #{local_statistics_network_forward.1} parent=55 // pred_check
        %p1729 = pneg %p201
      $region58: #{local_statistics_network_forward.1} parent=55 // pred_check_branch
        %1731 = sbr.rel (%p1729) target = $region60
      $region59: #{local_statistics_network_forward.1} parent=55 // pred_region
        %p1732 = scmp.lt.s32.totalorder %s21, 1
        %s1733 = scalar_select %p1732, %s21, 1
        %s1734 = smul.addr %s1733, 2
        %s1735 = scalar_lea.vmem %s7, %s1734
      $region60: #{local_statistics_network_forward.1} parent=55 // pred_fallthru
        _
    $region56: #{local_statistics_network_forward.1} parent=5 // pred_fallthru
      _
  $region6: #{local_statistics_network_forward.1} parent=0 // loop_footer
    %s19 = sadd.s32 1, %s15
  $region7: #{local_statistics_network_forward.1} parent=0 // loop_footer_branch
    %14 = sbr.rel target = $region3
  $region8: #{local_statistics_network_forward.1} parent=0 // loop_exit
    _

</llo_original>
